<compile_context>
chip_gen: v7x
topology: tpu7x:2x2x1
jax: 0.10.0
libtpu: 0.0.40
codegen_flags: <defaults>
</compile_context>

<pallas_src>
import jax
import jax.numpy as jnp
from jax.experimental import pallas as pl
from jax.experimental.pallas import tpu as pltpu

D_IN = 4


def _round_up(v, m):
    return ((v + m - 1) // m) * m


def _mlp_kernel(x_ref, w1_ref, b1_ref, w2_ref, b2_ref, w3_ref, b3_ref,
                w4_ref, b4_ref, o_ref):
    # x arrives f32; layer 1 runs on the VPU (K=4 contraction as broadcast
    # FMAs) so the MXU is not wasted on a 4-deep contraction (v5e win).
    x = x_ref[...]                       # (bn, 4) f32
    w1 = w1_ref[...]                     # (4, 128) f32

    h = b1_ref[...] + x[:, 0:1] * w1[0:1, :]
    h = h + x[:, 1:2] * w1[1:2, :]
    h = h + x[:, 2:3] * w1[2:3, :]
    h = h + x[:, 3:4] * w1[3:4, :]
    h = jnp.maximum(h, 0.0)              # (bn, 128) f32

    # Layers 2-4: bf16 MXU operands, f32 accumulate; bias + ReLU in f32 (VPU).
    h = jnp.dot(h.astype(w2_ref.dtype), w2_ref[...],
                preferred_element_type=jnp.float32) + b2_ref[...]
    h = jnp.maximum(h, 0.0)              # (bn, 256) f32

    h = jnp.dot(h.astype(w3_ref.dtype), w3_ref[...],
                preferred_element_type=jnp.float32) + b3_ref[...]
    h = jnp.maximum(h, 0.0)              # (bn, 256) f32

    out = jnp.dot(h.astype(w4_ref.dtype), w4_ref[...],
                  preferred_element_type=jnp.float32) + b4_ref[...]
    o_ref[...] = out.astype(o_ref.dtype)  # (bn, 2) f32


@jax.jit
def mlp_forward(x, kparams):
    """x: (N, 4) float32.  kparams: output of prepare_params()."""
    n, d_in = x.shape
    d_out = kparams["w4"].shape[1]

    # Tile selection: big enough to amortize per-grid-step overhead, but keep
    # the grid >= 2 steps when N allows (both v7x TensorCores busy).
    block_n = min(1024, max(256, _round_up(pl.cdiv(n, 2), 256)))
    n_pad = _round_up(n, block_n)

    xb = x
    if n_pad != n:
        # Tiny (N, 4) pad only; padded rows compute relu(b) garbage that is
        # sliced off below.
        xb = jnp.pad(x, ((0, n_pad - n), (0, 0)))

    full = lambda arr: pl.BlockSpec(arr.shape, lambda i: (0, 0))

    grid_spec = pltpu.PrefetchScalarGridSpec(
        num_scalar_prefetch=0,
        grid=(n_pad // block_n,),
        in_specs=[
            pl.BlockSpec((block_n, d_in), lambda i: (i, 0)),
            full(kparams["w1"]), full(kparams["b1"]),
            full(kparams["w2"]), full(kparams["b2"]),
            full(kparams["w3"]), full(kparams["b3"]),
            full(kparams["w4"]), full(kparams["b4"]),
        ],
        out_specs=pl.BlockSpec((block_n, d_out), lambda i: (i, 0)),
    )

    out = pl.pallas_call(
        _mlp_kernel,
        out_shape=jax.ShapeDtypeStruct((n_pad, d_out), jnp.float32),
        grid_spec=grid_spec,
        compiler_params=pltpu.CompilerParams(
            dimension_semantics=("parallel",)),
    )(xb,
      kparams["w1"], kparams["b1"],
      kparams["w2"], kparams["b2"],
      kparams["w3"], kparams["b3"],
      kparams["w4"], kparams["b4"])

    return out[:n]


def init_params(key, output_dim=2):
    """Deterministic PyTorch-style init: U(-1/sqrt(fan_in), 1/sqrt(fan_in)).
    Weights stored as (in, out) = transpose of torch's (out, in)."""
    dims = [(4, 128), (128, 256), (256, 256), (256, output_dim)]
    params = {}
    for idx, (fan_in, fan_out) in enumerate(dims, start=1):
        key, kw, kb = jax.random.split(key, 3)
        bound = 1.0 / jnp.sqrt(jnp.float32(fan_in))
        params[f"w{idx}"] = jax.random.uniform(
            kw, (fan_in, fan_out), jnp.float32, minval=-bound, maxval=bound)
        params[f"b{idx}"] = jax.random.uniform(
            kb, (1, fan_out), jnp.float32, minval=-bound, maxval=bound)
    return params


def prepare_params(params):
    """One-time, kernel-ready params: layer 1 stays f32 (VPU path), layers
    2-4 weights pre-cast to bf16 (MXU operands); biases stay f32."""
    return {
        "w1": params["w1"].astype(jnp.float32),
        "b1": params["b1"].astype(jnp.float32),
        "w2": params["w2"].astype(jnp.bfloat16),
        "b2": params["b2"].astype(jnp.float32),
        "w3": params["w3"].astype(jnp.bfloat16),
        "b3": params["b3"].astype(jnp.float32),
        "w4": params["w4"].astype(jnp.bfloat16),
        "b4": params["b4"].astype(jnp.float32),
    }


def mlp_reference(x, params):
    """Mirrors the kernel's numerics: layer 1 in f32, layers 2-4 with bf16
    MXU operands and f32 accumulate / bias / ReLU."""
    h = jnp.maximum(jnp.dot(x, params["w1"]) + params["b1"], 0.0)
    for i in (2, 3):
        w = params[f"w{i}"].astype(jnp.bfloat16)
        h = jnp.dot(h.astype(jnp.bfloat16), w,
                    preferred_element_type=jnp.float32) + params[f"b{i}"]
        h = jnp.maximum(h, 0.0)
    w4 = params["w4"].astype(jnp.bfloat16)
    return jnp.dot(h.astype(jnp.bfloat16), w4,
                   preferred_element_type=jnp.float32) + params["b4"]


if __name__ == "__main__":
    key = jax.random.PRNGKey(0)
    key, kx1, kx2 = jax.random.split(key, 3)
    params = init_params(key, output_dim=2)
    kparams = prepare_params(params)

    # Small batch (exercises tail padding: 8 rows -> one 256-row tile).
    x_small = jax.random.normal(kx1, (8, 4), jnp.float32)
    out_small = jax.block_until_ready(mlp_forward(x_small, kparams))
    ref_small = mlp_reference(x_small, params)
    assert out_small.shape == (8, 2)
    assert jnp.allclose(out_small, ref_small, atol=1e-2, rtol=1e-2), "mismatch (small)"

    # Non-multiple batch spanning 2 grid steps (exercises grid + megacore sharding).
    x_big = jax.random.normal(kx2, (300, 4), jnp.float32)
    out_big = jax.block_until_ready(mlp_forward(x_big, kparams))
    ref_big = mlp_reference(x_big, params)
    assert out_big.shape == (300, 2)
    assert jnp.allclose(out_big, ref_big, atol=1e-2, rtol=1e-2), "mismatch (big)"

    print("KERNEL_OK")
</pallas_src>

<mosaic_0001>
module attributes {stable_mosaic.version = 11 : i64} {
  func.func @_mlp_kernel(%arg0: i32, %arg1: memref<256x4xf32, #tpu.memory_space<vmem>>, %arg2: memref<4x128xf32, #tpu.memory_space<vmem>>, %arg3: memref<1x128xf32, #tpu.memory_space<vmem>>, %arg4: memref<128x256xbf16, #tpu.memory_space<vmem>>, %arg5: memref<1x256xf32, #tpu.memory_space<vmem>>, %arg6: memref<256x256xbf16, #tpu.memory_space<vmem>>, %arg7: memref<1x256xf32, #tpu.memory_space<vmem>>, %arg8: memref<256x2xbf16, #tpu.memory_space<vmem>>, %arg9: memref<1x2xf32, #tpu.memory_space<vmem>>, %arg10: memref<256x2xf32, #tpu.memory_space<vmem>>) attributes {dimension_semantics = [#tpu.dimension_semantics<parallel>], iteration_bounds = array<i64: 1>, scalar_prefetch = 0 : i64, scratch_operands = 0 : i64, tpu.core_type = #tpu.core_type<tc>, window_params = [{transform_indices = @transform_0, window_bounds = array<i64: 256, 4>}, {pipeline_mode = #tpu.pipeline_mode<synchronous>, transform_indices = @transform_1, window_bounds = array<i64: 4, 128>}, {pipeline_mode = #tpu.pipeline_mode<synchronous>, transform_indices = @transform_2, window_bounds = array<i64: 1, 128>}, {pipeline_mode = #tpu.pipeline_mode<synchronous>, transform_indices = @transform_3, window_bounds = array<i64: 128, 256>}, {pipeline_mode = #tpu.pipeline_mode<synchronous>, transform_indices = @transform_4, window_bounds = array<i64: 1, 256>}, {pipeline_mode = #tpu.pipeline_mode<synchronous>, transform_indices = @transform_5, window_bounds = array<i64: 256, 256>}, {pipeline_mode = #tpu.pipeline_mode<synchronous>, transform_indices = @transform_6, window_bounds = array<i64: 1, 256>}, {pipeline_mode = #tpu.pipeline_mode<synchronous>, transform_indices = @transform_7, window_bounds = array<i64: 256, 2>}, {pipeline_mode = #tpu.pipeline_mode<synchronous>, transform_indices = @transform_8, window_bounds = array<i64: 1, 2>}, {transform_indices = @transform_9, window_bounds = array<i64: 256, 2>}]} {
    %c0 = arith.constant 0 : index
    %c0_0 = arith.constant 0 : index
    %0 = vector.load %arg1[%c0, %c0_0] : memref<256x4xf32, #tpu.memory_space<vmem>>, vector<256x4xf32>
    %c0_1 = arith.constant 0 : index
    %c0_2 = arith.constant 0 : index
    %1 = vector.load %arg2[%c0_1, %c0_2] : memref<4x128xf32, #tpu.memory_space<vmem>>, vector<4x128xf32>
    %c0_3 = arith.constant 0 : index
    %c0_4 = arith.constant 0 : index
    %2 = vector.load %arg3[%c0_3, %c0_4] : memref<1x128xf32, #tpu.memory_space<vmem>>, vector<1x128xf32>
    %3 = vector.extract_strided_slice %0 {offsets = [0, 0], sizes = [256, 1], strides = [1, 1]} : vector<256x4xf32> to vector<256x1xf32>
    %4 = vector.extract_strided_slice %1 {offsets = [0, 0], sizes = [1, 128], strides = [1, 1]} : vector<4x128xf32> to vector<1x128xf32>
    %5 = vector.broadcast %3 : vector<256x1xf32> to vector<256x128xf32>
    %6 = vector.broadcast %4 : vector<1x128xf32> to vector<256x128xf32>
    %7 = arith.mulf %5, %6 : vector<256x128xf32>
    %8 = vector.broadcast %2 : vector<1x128xf32> to vector<256x128xf32>
    %9 = arith.addf %8, %7 : vector<256x128xf32>
    %10 = vector.extract_strided_slice %0 {offsets = [0, 1], sizes = [256, 1], strides = [1, 1]} : vector<256x4xf32> to vector<256x1xf32>
    %11 = vector.extract_strided_slice %1 {offsets = [1, 0], sizes = [1, 128], strides = [1, 1]} : vector<4x128xf32> to vector<1x128xf32>
    %12 = vector.broadcast %10 : vector<256x1xf32> to vector<256x128xf32>
    %13 = vector.broadcast %11 : vector<1x128xf32> to vector<256x128xf32>
    %14 = arith.mulf %12, %13 : vector<256x128xf32>
    %15 = arith.addf %9, %14 : vector<256x128xf32>
    %16 = vector.extract_strided_slice %0 {offsets = [0, 2], sizes = [256, 1], strides = [1, 1]} : vector<256x4xf32> to vector<256x1xf32>
    %17 = vector.extract_strided_slice %1 {offsets = [2, 0], sizes = [1, 128], strides = [1, 1]} : vector<4x128xf32> to vector<1x128xf32>
    %18 = vector.broadcast %16 : vector<256x1xf32> to vector<256x128xf32>
    %19 = vector.broadcast %17 : vector<1x128xf32> to vector<256x128xf32>
    %20 = arith.mulf %18, %19 : vector<256x128xf32>
    %21 = arith.addf %15, %20 : vector<256x128xf32>
    %22 = vector.extract_strided_slice %0 {offsets = [0, 3], sizes = [256, 1], strides = [1, 1]} : vector<256x4xf32> to vector<256x1xf32>
    %23 = vector.extract_strided_slice %1 {offsets = [3, 0], sizes = [1, 128], strides = [1, 1]} : vector<4x128xf32> to vector<1x128xf32>
    %24 = vector.broadcast %22 : vector<256x1xf32> to vector<256x128xf32>
    %25 = vector.broadcast %23 : vector<1x128xf32> to vector<256x128xf32>
    %26 = arith.mulf %24, %25 : vector<256x128xf32>
    %27 = arith.addf %21, %26 : vector<256x128xf32>
    %cst = arith.constant 0.000000e+00 : f32
    %28 = vector.broadcast %cst : f32 to vector<256x128xf32>
    %29 = arith.maximumf %27, %28 : vector<256x128xf32>
    %30 = arith.truncf %29 : vector<256x128xf32> to vector<256x128xbf16>
    %c0_5 = arith.constant 0 : index
    %c0_6 = arith.constant 0 : index
    %31 = vector.load %arg4[%c0_5, %c0_6] : memref<128x256xbf16, #tpu.memory_space<vmem>>, vector<128x256xbf16>
    %cst_7 = arith.constant dense<0.000000e+00> : vector<256x256xf32>
    %32 = tpu.matmul %30, %31, %cst_7 {dimension_numbers = #tpu.dot_dimension_numbers<[1], [0], [0], [1], [0, 0, 1, 1], [], []>} : vector<256x128xbf16>, vector<128x256xbf16>, vector<256x256xf32> -> vector<256x256xf32>
    %c0_8 = arith.constant 0 : index
    %c0_9 = arith.constant 0 : index
    %33 = vector.load %arg5[%c0_8, %c0_9] : memref<1x256xf32, #tpu.memory_space<vmem>>, vector<1x256xf32>
    %34 = vector.broadcast %33 : vector<1x256xf32> to vector<256x256xf32>
    %35 = arith.addf %32, %34 : vector<256x256xf32>
    %cst_10 = arith.constant 0.000000e+00 : f32
    %36 = vector.broadcast %cst_10 : f32 to vector<256x256xf32>
    %37 = arith.maximumf %35, %36 : vector<256x256xf32>
    %38 = arith.truncf %37 : vector<256x256xf32> to vector<256x256xbf16>
    %c0_11 = arith.constant 0 : index
    %c0_12 = arith.constant 0 : index
    %39 = vector.load %arg6[%c0_11, %c0_12] : memref<256x256xbf16, #tpu.memory_space<vmem>>, vector<256x256xbf16>
    %cst_13 = arith.constant dense<0.000000e+00> : vector<256x256xf32>
    %40 = tpu.matmul %38, %39, %cst_13 {dimension_numbers = #tpu.dot_dimension_numbers<[1], [0], [0], [1], [0, 0, 1, 1], [], []>} : vector<256x256xbf16>, vector<256x256xbf16>, vector<256x256xf32> -> vector<256x256xf32>
    %c0_14 = arith.constant 0 : index
    %c0_15 = arith.constant 0 : index
    %41 = vector.load %arg7[%c0_14, %c0_15] : memref<1x256xf32, #tpu.memory_space<vmem>>, vector<1x256xf32>
    %42 = vector.broadcast %41 : vector<1x256xf32> to vector<256x256xf32>
    %43 = arith.addf %40, %42 : vector<256x256xf32>
    %cst_16 = arith.constant 0.000000e+00 : f32
    %44 = vector.broadcast %cst_16 : f32 to vector<256x256xf32>
    %45 = arith.maximumf %43, %44 : vector<256x256xf32>
    %46 = arith.truncf %45 : vector<256x256xf32> to vector<256x256xbf16>
    %c0_17 = arith.constant 0 : index
    %c0_18 = arith.constant 0 : index
    %47 = vector.load %arg8[%c0_17, %c0_18] : memref<256x2xbf16, #tpu.memory_space<vmem>>, vector<256x2xbf16>
    %cst_19 = arith.constant dense<0.000000e+00> : vector<256x2xf32>
    %48 = tpu.matmul %46, %47, %cst_19 {dimension_numbers = #tpu.dot_dimension_numbers<[1], [0], [0], [1], [0, 0, 1, 1], [], []>} : vector<256x256xbf16>, vector<256x2xbf16>, vector<256x2xf32> -> vector<256x2xf32>
    %c0_20 = arith.constant 0 : index
    %c0_21 = arith.constant 0 : index
    %49 = vector.load %arg9[%c0_20, %c0_21] : memref<1x2xf32, #tpu.memory_space<vmem>>, vector<1x2xf32>
    %50 = vector.broadcast %49 : vector<1x2xf32> to vector<256x2xf32>
    %51 = arith.addf %48, %50 : vector<256x2xf32>
    %c0_22 = arith.constant 0 : index
    %c0_23 = arith.constant 0 : index
    %52 = vector.load %arg10[%c0_22, %c0_23] : memref<256x2xf32, #tpu.memory_space<vmem>>, vector<256x2xf32>
    tpu.vector_store %arg10[%c0_22, %c0_23], %51 {strides = array<i32>} : memref<256x2xf32, #tpu.memory_space<vmem>>, vector<256x2xf32>,
    return
  }
  func.func @transform_0(%arg0: i32) -> (i32, i32) {
    %c0_i32 = arith.constant 0 : i32
    %c0_i32_0 = arith.constant 0 : i32
    return %arg0, %c0_i32 : i32, i32
  }
  func.func @transform_1(%arg0: i32) -> (i32, i32) {
    %c0_i32 = arith.constant 0 : i32
    %c0_i32_0 = arith.constant 0 : i32
    %c0_i32_1 = arith.constant 0 : i32
    return %c0_i32, %c0_i32_0 : i32, i32
  }
  func.func @transform_2(%arg0: i32) -> (i32, i32) {
    %c0_i32 = arith.constant 0 : i32
    %c0_i32_0 = arith.constant 0 : i32
    %c0_i32_1 = arith.constant 0 : i32
    return %c0_i32, %c0_i32_0 : i32, i32
  }
  func.func @transform_3(%arg0: i32) -> (i32, i32) {
    %c0_i32 = arith.constant 0 : i32
    %c0_i32_0 = arith.constant 0 : i32
    %c0_i32_1 = arith.constant 0 : i32
    return %c0_i32, %c0_i32_0 : i32, i32
  }
  func.func @transform_4(%arg0: i32) -> (i32, i32) {
    %c0_i32 = arith.constant 0 : i32
    %c0_i32_0 = arith.constant 0 : i32
    %c0_i32_1 = arith.constant 0 : i32
    return %c0_i32, %c0_i32_0 : i32, i32
  }
  func.func @transform_5(%arg0: i32) -> (i32, i32) {
    %c0_i32 = arith.constant 0 : i32
    %c0_i32_0 = arith.constant 0 : i32
    %c0_i32_1 = arith.constant 0 : i32
    return %c0_i32, %c0_i32_0 : i32, i32
  }
  func.func @transform_6(%arg0: i32) -> (i32, i32) {
    %c0_i32 = arith.constant 0 : i32
    %c0_i32_0 = arith.constant 0 : i32
    %c0_i32_1 = arith.constant 0 : i32
    return %c0_i32, %c0_i32_0 : i32, i32
  }
  func.func @transform_7(%arg0: i32) -> (i32, i32) {
    %c0_i32 = arith.constant 0 : i32
    %c0_i32_0 = arith.constant 0 : i32
    %c0_i32_1 = arith.constant 0 : i32
    return %c0_i32, %c0_i32_0 : i32, i32
  }
  func.func @transform_8(%arg0: i32) -> (i32, i32) {
    %c0_i32 = arith.constant 0 : i32
    %c0_i32_0 = arith.constant 0 : i32
    %c0_i32_1 = arith.constant 0 : i32
    return %c0_i32, %c0_i32_0 : i32, i32
  }
  func.func @transform_9(%arg0: i32) -> (i32, i32) {
    %c0_i32 = arith.constant 0 : i32
    %c0_i32_0 = arith.constant 0 : i32
    return %arg0, %c0_i32 : i32, i32
  }
}

</mosaic_0001>

<llo_original>
// kernel: mlp_forward.1
$region0: #{mlp_forward.1}
  #allocation0 [shape = 'u32[]', space=smem, size = 0x4, offset = 0x4, fixed_abs, tag = 'smem constant byte address 0x4 - core index']
  #allocation1 [shape = 'u32[144,128]{1,0:T(1,128)}', space=vmem, size = 0x12000, scoped, tag = 'internal scratch']
  %s0 = inlined_call_operand.vmem [shape: f32[256,4], index: 0, kind: input, shape index: {}]
  %s1 = inlined_call_operand.vmem [shape: f32[4,128], index: 1, kind: input, shape index: {}]
  %s2 = inlined_call_operand.vmem [shape: f32[1,128], index: 2, kind: input, shape index: {}]
  %s3 = inlined_call_operand.vmem [shape: bf16[128,256], index: 3, kind: input, shape index: {}]
  %s4 = inlined_call_operand.vmem [shape: f32[1,256], index: 4, kind: input, shape index: {}]
  %s5 = inlined_call_operand.vmem [shape: bf16[256,256], index: 5, kind: input, shape index: {}]
  %s6 = inlined_call_operand.vmem [shape: f32[1,256], index: 6, kind: input, shape index: {}]
  %s7 = inlined_call_operand.vmem [shape: bf16[256,2], index: 7, kind: input, shape index: {}]
  %s8 = inlined_call_operand.vmem [shape: f32[1,2], index: 8, kind: input, shape index: {}]
  %s9 = inlined_call_operand.vmem [shape: f32[256,2], index: 9, kind: output, shape index: {}]
  %s10 = sld [smem:[#allocation0]]
  $region46: #{mlp_forward.1} parent=0
    _
  %s12 = ssub.s32 1, %s10
  %s13 = scalar_select 0, %s12, %s10
  // Predicated region
  $region2: #{mlp_forward.1} parent=0 // pred_check
    _
  $region3: #{mlp_forward.1} parent=0 // pred_check_branch
    %15 = sbr.rel (0) target = $region5
  $region4: #{mlp_forward.1} parent=0 // pred_region
    _
  $region5: #{mlp_forward.1} parent=0 // pred_fallthru
    _
  // Predicated region
  $region6: #{mlp_forward.1} parent=0 // pred_check
    _
  $region7: #{mlp_forward.1} parent=0 // pred_check_branch
    %17 = sbr.rel (0) target = $region9
  $region8: #{mlp_forward.1} parent=0 // pred_region
    _
  $region9: #{mlp_forward.1} parent=0 // pred_fallthru
    _
  // Predicated region
  $region10: #{mlp_forward.1} parent=0 // pred_check
    _
  $region11: #{mlp_forward.1} parent=0 // pred_check_branch
    %19 = sbr.rel (0) target = $region13
  $region12: #{mlp_forward.1} parent=0 // pred_region
    _
  $region13: #{mlp_forward.1} parent=0 // pred_fallthru
    _
  // Predicated region
  $region14: #{mlp_forward.1} parent=0 // pred_check
    _
  $region15: #{mlp_forward.1} parent=0 // pred_check_branch
    %21 = sbr.rel (0) target = $region17
  $region16: #{mlp_forward.1} parent=0 // pred_region
    _
  $region17: #{mlp_forward.1} parent=0 // pred_fallthru
    _
  // Predicated region
  $region18: #{mlp_forward.1} parent=0 // pred_check
    _
  $region19: #{mlp_forward.1} parent=0 // pred_check_branch
    %23 = sbr.rel (0) target = $region21
  $region20: #{mlp_forward.1} parent=0 // pred_region
    _
  $region21: #{mlp_forward.1} parent=0 // pred_fallthru
    _
  // Predicated region
  $region22: #{mlp_forward.1} parent=0 // pred_check
    _
  $region23: #{mlp_forward.1} parent=0 // pred_check_branch
    %25 = sbr.rel (0) target = $region25
  $region24: #{mlp_forward.1} parent=0 // pred_region
    _
  $region25: #{mlp_forward.1} parent=0 // pred_fallthru
    _
  // Predicated region
  $region26: #{mlp_forward.1} parent=0 // pred_check
    _
  $region27: #{mlp_forward.1} parent=0 // pred_check_branch
    %27 = sbr.rel (0) target = $region29
  $region28: #{mlp_forward.1} parent=0 // pred_region
    _
  $region29: #{mlp_forward.1} parent=0 // pred_fallthru
    _
  // Predicated region
  $region30: #{mlp_forward.1} parent=0 // pred_check
    _
  $region31: #{mlp_forward.1} parent=0 // pred_check_branch
    %29 = sbr.rel (0) target = $region33
  $region32: #{mlp_forward.1} parent=0 // pred_region
    _
  $region33: #{mlp_forward.1} parent=0 // pred_fallthru
    _
  // Predicated region
  $region34: #{mlp_forward.1} parent=0 // pred_check
    _
  $region35: #{mlp_forward.1} parent=0 // pred_check_branch
    %31 = sbr.rel (0) target = $region37
  $region36: #{mlp_forward.1} parent=0 // pred_region
    _
  $region37: #{mlp_forward.1} parent=0 // pred_fallthru
    _
  %v33 = vld [vmem:[%s0] sm:$0xff]
  %v34 = vld [vmem:[%s0 + $0x8] sm:$0xff]
  %v35 = vld [vmem:[%s0 + $0x10] sm:$0xff]
  %v36 = vld [vmem:[%s0 + $0x18] sm:$0xff]
  %v37 = vld [vmem:[%s0 + $0x20] sm:$0xff]
  %v38 = vld [vmem:[%s0 + $0x28] sm:$0xff]
  %v39 = vld [vmem:[%s0 + $0x30] sm:$0xff]
  %v40 = vld [vmem:[%s0 + $0x38] sm:$0xff]
  %v41 = vld [vmem:[%s0 + $0x40] sm:$0xff]
  %v42 = vld [vmem:[%s0 + $0x48] sm:$0xff]
  %v43 = vld [vmem:[%s0 + $0x50] sm:$0xff]
  %v44 = vld [vmem:[%s0 + $0x58] sm:$0xff]
  %v45 = vld [vmem:[%s0 + $0x60] sm:$0xff]
  %v46 = vld [vmem:[%s0 + $0x68] sm:$0xff]
  %v47 = vld [vmem:[%s0 + $0x70] sm:$0xff]
  %v48 = vld [vmem:[%s0 + $0x78] sm:$0xff]
  %v49 = vld [vmem:[%s0 + $0x80] sm:$0xff]
  %v50 = vld [vmem:[%s0 + $0x88] sm:$0xff]
  %v51 = vld [vmem:[%s0 + $0x90] sm:$0xff]
  %v52 = vld [vmem:[%s0 + $0x98] sm:$0xff]
  %v53 = vld [vmem:[%s0 + $0xa0] sm:$0xff]
  %v54 = vld [vmem:[%s0 + $0xa8] sm:$0xff]
  %v55 = vld [vmem:[%s0 + $0xb0] sm:$0xff]
  %v56 = vld [vmem:[%s0 + $0xb8] sm:$0xff]
  %v57 = vld [vmem:[%s0 + $0xc0] sm:$0xff]
  %v58 = vld [vmem:[%s0 + $0xc8] sm:$0xff]
  %v59 = vld [vmem:[%s0 + $0xd0] sm:$0xff]
  %v60 = vld [vmem:[%s0 + $0xd8] sm:$0xff]
  %v61 = vld [vmem:[%s0 + $0xe0] sm:$0xff]
  %v62 = vld [vmem:[%s0 + $0xe8] sm:$0xff]
  %v63 = vld [vmem:[%s0 + $0xf0] sm:$0xff]
  %v64 = vld [vmem:[%s0 + $0xf8] sm:$0xff]
  %v65 = vld [vmem:[%s1] sm:$0xf]
  %v66 = vld [vmem:[%s2] sm:$0x1]
  %68 = vset.pattern.permute.xlu0 0
  %69 = vperm.xlu0 %68, %v33
  %v70 = vpop.permute.xlu0 %69
  %73 = vset.pattern.permute.xlu0 0
  %74 = vperm.xlu0 %73, %v34
  %v75 = vpop.permute.xlu0 %74
  %78 = vset.pattern.permute.xlu0 0
  %79 = vperm.xlu0 %78, %v35
  %v80 = vpop.permute.xlu0 %79
  %83 = vset.pattern.permute.xlu0 0
  %84 = vperm.xlu0 %83, %v36
  %v85 = vpop.permute.xlu0 %84
  %88 = vset.pattern.permute.xlu0 0
  %89 = vperm.xlu0 %88, %v37
  %v90 = vpop.permute.xlu0 %89
  %93 = vset.pattern.permute.xlu0 0
  %94 = vperm.xlu0 %93, %v38
  %v95 = vpop.permute.xlu0 %94
  %98 = vset.pattern.permute.xlu0 0
  %99 = vperm.xlu0 %98, %v39
  %v100 = vpop.permute.xlu0 %99
  %103 = vset.pattern.permute.xlu0 0
  %104 = vperm.xlu0 %103, %v40
  %v105 = vpop.permute.xlu0 %104
  %108 = vset.pattern.permute.xlu0 0
  %109 = vperm.xlu0 %108, %v41
  %v110 = vpop.permute.xlu0 %109
  %113 = vset.pattern.permute.xlu0 0
  %114 = vperm.xlu0 %113, %v42
  %v115 = vpop.permute.xlu0 %114
  %118 = vset.pattern.permute.xlu0 0
  %119 = vperm.xlu0 %118, %v43
  %v120 = vpop.permute.xlu0 %119
  %123 = vset.pattern.permute.xlu0 0
  %124 = vperm.xlu0 %123, %v44
  %v125 = vpop.permute.xlu0 %124
  %128 = vset.pattern.permute.xlu0 0
  %129 = vperm.xlu0 %128, %v45
  %v130 = vpop.permute.xlu0 %129
  %133 = vset.pattern.permute.xlu0 0
  %134 = vperm.xlu0 %133, %v46
  %v135 = vpop.permute.xlu0 %134
  %138 = vset.pattern.permute.xlu0 0
  %139 = vperm.xlu0 %138, %v47
  %v140 = vpop.permute.xlu0 %139
  %143 = vset.pattern.permute.xlu0 0
  %144 = vperm.xlu0 %143, %v48
  %v145 = vpop.permute.xlu0 %144
  %148 = vset.pattern.permute.xlu0 0
  %149 = vperm.xlu0 %148, %v49
  %v150 = vpop.permute.xlu0 %149
  %153 = vset.pattern.permute.xlu0 0
  %154 = vperm.xlu0 %153, %v50
  %v155 = vpop.permute.xlu0 %154
  %158 = vset.pattern.permute.xlu0 0
  %159 = vperm.xlu0 %158, %v51
  %v160 = vpop.permute.xlu0 %159
  %163 = vset.pattern.permute.xlu0 0
  %164 = vperm.xlu0 %163, %v52
  %v165 = vpop.permute.xlu0 %164
  %168 = vset.pattern.permute.xlu0 0
  %169 = vperm.xlu0 %168, %v53
  %v170 = vpop.permute.xlu0 %169
  %173 = vset.pattern.permute.xlu0 0
  %174 = vperm.xlu0 %173, %v54
  %v175 = vpop.permute.xlu0 %174
  %178 = vset.pattern.permute.xlu0 0
  %179 = vperm.xlu0 %178, %v55
  %v180 = vpop.permute.xlu0 %179
  %183 = vset.pattern.permute.xlu0 0
  %184 = vperm.xlu0 %183, %v56
  %v185 = vpop.permute.xlu0 %184
  %188 = vset.pattern.permute.xlu0 0
  %189 = vperm.xlu0 %188, %v57
  %v190 = vpop.permute.xlu0 %189
  %193 = vset.pattern.permute.xlu0 0
  %194 = vperm.xlu0 %193, %v58
  %v195 = vpop.permute.xlu0 %194
  %198 = vset.pattern.permute.xlu0 0
  %199 = vperm.xlu0 %198, %v59
  %v200 = vpop.permute.xlu0 %199
  %203 = vset.pattern.permute.xlu0 0
  %204 = vperm.xlu0 %203, %v60
  %v205 = vpop.permute.xlu0 %204
  %208 = vset.pattern.permute.xlu0 0
  %209 = vperm.xlu0 %208, %v61
  %v210 = vpop.permute.xlu0 %209
  %213 = vset.pattern.permute.xlu0 0
  %214 = vperm.xlu0 %213, %v62
  %v215 = vpop.permute.xlu0 %214
  %218 = vset.pattern.permute.xlu0 0
  %219 = vperm.xlu0 %218, %v63
  %v220 = vpop.permute.xlu0 %219
  %223 = vset.pattern.permute.xlu0 0
  %224 = vperm.xlu0 %223, %v64
  %v225 = vpop.permute.xlu0 %224
  %v227 = vlaneseq
  %v228 = vshrl.u32 %v227, 7
  %v229 = vsub.s32 0, %v228
  %v230 = vrot.slane %v65, %v229
  %v231 = vmul.f32 %v70, %v230
  %v232 = vmul.f32 %v75, %v230
  %v233 = vmul.f32 %v80, %v230
  %v234 = vmul.f32 %v85, %v230
  %v235 = vmul.f32 %v90, %v230
  %v236 = vmul.f32 %v95, %v230
  %v237 = vmul.f32 %v100, %v230
  %v238 = vmul.f32 %v105, %v230
  %v239 = vmul.f32 %v110, %v230
  %v240 = vmul.f32 %v115, %v230
  %v241 = vmul.f32 %v120, %v230
  %v242 = vmul.f32 %v125, %v230
  %v243 = vmul.f32 %v130, %v230
  %v244 = vmul.f32 %v135, %v230
  %v245 = vmul.f32 %v140, %v230
  %v246 = vmul.f32 %v145, %v230
  %v247 = vmul.f32 %v150, %v230
  %v248 = vmul.f32 %v155, %v230
  %v249 = vmul.f32 %v160, %v230
  %v250 = vmul.f32 %v165, %v230
  %v251 = vmul.f32 %v170, %v230
  %v252 = vmul.f32 %v175, %v230
  %v253 = vmul.f32 %v180, %v230
  %v254 = vmul.f32 %v185, %v230
  %v255 = vmul.f32 %v190, %v230
  %v256 = vmul.f32 %v195, %v230
  %v257 = vmul.f32 %v200, %v230
  %v258 = vmul.f32 %v205, %v230
  %v259 = vmul.f32 %v210, %v230
  %v260 = vmul.f32 %v215, %v230
  %v261 = vmul.f32 %v220, %v230
  %v262 = vmul.f32 %v225, %v230
  %v264 = vlaneseq
  %v265 = vshrl.u32 %v264, 7
  %v266 = vsub.s32 0, %v265
  %v267 = vrot.slane %v66, %v266
  %v269 = vadd.f32 %v267, %v231
  %v270 = vadd.f32 %v267, %v232
  %v271 = vadd.f32 %v267, %v233
  %v272 = vadd.f32 %v267, %v234
  %v273 = vadd.f32 %v267, %v235
  %v274 = vadd.f32 %v267, %v236
  %v275 = vadd.f32 %v267, %v237
  %v276 = vadd.f32 %v267, %v238
  %v277 = vadd.f32 %v267, %v239
  %v278 = vadd.f32 %v267, %v240
  %v279 = vadd.f32 %v267, %v241
  %v280 = vadd.f32 %v267, %v242
  %v281 = vadd.f32 %v267, %v243
  %v282 = vadd.f32 %v267, %v244
  %v283 = vadd.f32 %v267, %v245
  %v284 = vadd.f32 %v267, %v246
  %v285 = vadd.f32 %v267, %v247
  %v286 = vadd.f32 %v267, %v248
  %v287 = vadd.f32 %v267, %v249
  %v288 = vadd.f32 %v267, %v250
  %v289 = vadd.f32 %v267, %v251
  %v290 = vadd.f32 %v267, %v252
  %v291 = vadd.f32 %v267, %v253
  %v292 = vadd.f32 %v267, %v254
  %v293 = vadd.f32 %v267, %v255
  %v294 = vadd.f32 %v267, %v256
  %v295 = vadd.f32 %v267, %v257
  %v296 = vadd.f32 %v267, %v258
  %v297 = vadd.f32 %v267, %v259
  %v298 = vadd.f32 %v267, %v260
  %v299 = vadd.f32 %v267, %v261
  %v300 = vadd.f32 %v267, %v262
  %301 = vset.pattern.permute.xlu0 1
  %302 = vperm.xlu0 %301, %v33
  %v303 = vpop.permute.xlu0 %302
  %305 = vset.pattern.permute.xlu0 1
  %306 = vperm.xlu0 %305, %v34
  %v307 = vpop.permute.xlu0 %306
  %309 = vset.pattern.permute.xlu0 1
  %310 = vperm.xlu0 %309, %v35
  %v311 = vpop.permute.xlu0 %310
  %313 = vset.pattern.permute.xlu0 1
  %314 = vperm.xlu0 %313, %v36
  %v315 = vpop.permute.xlu0 %314
  %317 = vset.pattern.permute.xlu0 1
  %318 = vperm.xlu0 %317, %v37
  %v319 = vpop.permute.xlu0 %318
  %321 = vset.pattern.permute.xlu0 1
  %322 = vperm.xlu0 %321, %v38
  %v323 = vpop.permute.xlu0 %322
  %325 = vset.pattern.permute.xlu0 1
  %326 = vperm.xlu0 %325, %v39
  %v327 = vpop.permute.xlu0 %326
  %329 = vset.pattern.permute.xlu0 1
  %330 = vperm.xlu0 %329, %v40
  %v331 = vpop.permute.xlu0 %330
  %333 = vset.pattern.permute.xlu0 1
  %334 = vperm.xlu0 %333, %v41
  %v335 = vpop.permute.xlu0 %334
  %337 = vset.pattern.permute.xlu0 1
  %338 = vperm.xlu0 %337, %v42
  %v339 = vpop.permute.xlu0 %338
  %341 = vset.pattern.permute.xlu0 1
  %342 = vperm.xlu0 %341, %v43
  %v343 = vpop.permute.xlu0 %342
  %345 = vset.pattern.permute.xlu0 1
  %346 = vperm.xlu0 %345, %v44
  %v347 = vpop.permute.xlu0 %346
  %349 = vset.pattern.permute.xlu0 1
  %350 = vperm.xlu0 %349, %v45
  %v351 = vpop.permute.xlu0 %350
  %353 = vset.pattern.permute.xlu0 1
  %354 = vperm.xlu0 %353, %v46
  %v355 = vpop.permute.xlu0 %354
  %357 = vset.pattern.permute.xlu0 1
  %358 = vperm.xlu0 %357, %v47
  %v359 = vpop.permute.xlu0 %358
  %361 = vset.pattern.permute.xlu0 1
  %362 = vperm.xlu0 %361, %v48
  %v363 = vpop.permute.xlu0 %362
  %365 = vset.pattern.permute.xlu0 1
  %366 = vperm.xlu0 %365, %v49
  %v367 = vpop.permute.xlu0 %366
  %369 = vset.pattern.permute.xlu0 1
  %370 = vperm.xlu0 %369, %v50
  %v371 = vpop.permute.xlu0 %370
  %373 = vset.pattern.permute.xlu0 1
  %374 = vperm.xlu0 %373, %v51
  %v375 = vpop.permute.xlu0 %374
  %377 = vset.pattern.permute.xlu0 1
  %378 = vperm.xlu0 %377, %v52
  %v379 = vpop.permute.xlu0 %378
  %381 = vset.pattern.permute.xlu0 1
  %382 = vperm.xlu0 %381, %v53
  %v383 = vpop.permute.xlu0 %382
  %385 = vset.pattern.permute.xlu0 1
  %386 = vperm.xlu0 %385, %v54
  %v387 = vpop.permute.xlu0 %386
  %389 = vset.pattern.permute.xlu0 1
  %390 = vperm.xlu0 %389, %v55
  %v391 = vpop.permute.xlu0 %390
  %393 = vset.pattern.permute.xlu0 1
  %394 = vperm.xlu0 %393, %v56
  %v395 = vpop.permute.xlu0 %394
  %397 = vset.pattern.permute.xlu0 1
  %398 = vperm.xlu0 %397, %v57
  %v399 = vpop.permute.xlu0 %398
  %401 = vset.pattern.permute.xlu0 1
  %402 = vperm.xlu0 %401, %v58
  %v403 = vpop.permute.xlu0 %402
  %405 = vset.pattern.permute.xlu0 1
  %406 = vperm.xlu0 %405, %v59
  %v407 = vpop.permute.xlu0 %406
  %409 = vset.pattern.permute.xlu0 1
  %410 = vperm.xlu0 %409, %v60
  %v411 = vpop.permute.xlu0 %410
  %413 = vset.pattern.permute.xlu0 1
  %414 = vperm.xlu0 %413, %v61
  %v415 = vpop.permute.xlu0 %414
  %417 = vset.pattern.permute.xlu0 1
  %418 = vperm.xlu0 %417, %v62
  %v419 = vpop.permute.xlu0 %418
  %421 = vset.pattern.permute.xlu0 1
  %422 = vperm.xlu0 %421, %v63
  %v423 = vpop.permute.xlu0 %422
  %425 = vset.pattern.permute.xlu0 1
  %426 = vperm.xlu0 %425, %v64
  %v427 = vpop.permute.xlu0 %426
  %v429 = vlaneseq
  %v430 = vshrl.u32 %v429, 7
  %v431 = vsub.s32 1, %v430
  %v432 = vrot.slane %v65, %v431
  %v433 = vmul.f32 %v303, %v432
  %v434 = vmul.f32 %v307, %v432
  %v435 = vmul.f32 %v311, %v432
  %v436 = vmul.f32 %v315, %v432
  %v437 = vmul.f32 %v319, %v432
  %v438 = vmul.f32 %v323, %v432
  %v439 = vmul.f32 %v327, %v432
  %v440 = vmul.f32 %v331, %v432
  %v441 = vmul.f32 %v335, %v432
  %v442 = vmul.f32 %v339, %v432
  %v443 = vmul.f32 %v343, %v432
  %v444 = vmul.f32 %v347, %v432
  %v445 = vmul.f32 %v351, %v432
  %v446 = vmul.f32 %v355, %v432
  %v447 = vmul.f32 %v359, %v432
  %v448 = vmul.f32 %v363, %v432
  %v449 = vmul.f32 %v367, %v432
  %v450 = vmul.f32 %v371, %v432
  %v451 = vmul.f32 %v375, %v432
  %v452 = vmul.f32 %v379, %v432
  %v453 = vmul.f32 %v383, %v432
  %v454 = vmul.f32 %v387, %v432
  %v455 = vmul.f32 %v391, %v432
  %v456 = vmul.f32 %v395, %v432
  %v457 = vmul.f32 %v399, %v432
  %v458 = vmul.f32 %v403, %v432
  %v459 = vmul.f32 %v407, %v432
  %v460 = vmul.f32 %v411, %v432
  %v461 = vmul.f32 %v415, %v432
  %v462 = vmul.f32 %v419, %v432
  %v463 = vmul.f32 %v423, %v432
  %v464 = vmul.f32 %v427, %v432
  %v465 = vadd.f32 %v269, %v433
  %v466 = vadd.f32 %v270, %v434
  %v467 = vadd.f32 %v271, %v435
  %v468 = vadd.f32 %v272, %v436
  %v469 = vadd.f32 %v273, %v437
  %v470 = vadd.f32 %v274, %v438
  %v471 = vadd.f32 %v275, %v439
  %v472 = vadd.f32 %v276, %v440
  %v473 = vadd.f32 %v277, %v441
  %v474 = vadd.f32 %v278, %v442
  %v475 = vadd.f32 %v279, %v443
  %v476 = vadd.f32 %v280, %v444
  %v477 = vadd.f32 %v281, %v445
  %v478 = vadd.f32 %v282, %v446
  %v479 = vadd.f32 %v283, %v447
  %v480 = vadd.f32 %v284, %v448
  %v481 = vadd.f32 %v285, %v449
  %v482 = vadd.f32 %v286, %v450
  %v483 = vadd.f32 %v287, %v451
  %v484 = vadd.f32 %v288, %v452
  %v485 = vadd.f32 %v289, %v453
  %v486 = vadd.f32 %v290, %v454
  %v487 = vadd.f32 %v291, %v455
  %v488 = vadd.f32 %v292, %v456
  %v489 = vadd.f32 %v293, %v457
  %v490 = vadd.f32 %v294, %v458
  %v491 = vadd.f32 %v295, %v459
  %v492 = vadd.f32 %v296, %v460
  %v493 = vadd.f32 %v297, %v461
  %v494 = vadd.f32 %v298, %v462
  %v495 = vadd.f32 %v299, %v463
  %v496 = vadd.f32 %v300, %v464
  %497 = vset.pattern.permute.xlu0 2
  %498 = vperm.xlu0 %497, %v33
  %v499 = vpop.permute.xlu0 %498
  %501 = vset.pattern.permute.xlu0 2
  %502 = vperm.xlu0 %501, %v34
  %v503 = vpop.permute.xlu0 %502
  %505 = vset.pattern.permute.xlu0 2
  %506 = vperm.xlu0 %505, %v35
  %v507 = vpop.permute.xlu0 %506
  %509 = vset.pattern.permute.xlu0 2
  %510 = vperm.xlu0 %509, %v36
  %v511 = vpop.permute.xlu0 %510
  %513 = vset.pattern.permute.xlu0 2
  %514 = vperm.xlu0 %513, %v37
  %v515 = vpop.permute.xlu0 %514
  %517 = vset.pattern.permute.xlu0 2
  %518 = vperm.xlu0 %517, %v38
  %v519 = vpop.permute.xlu0 %518
  %521 = vset.pattern.permute.xlu0 2
  %522 = vperm.xlu0 %521, %v39
  %v523 = vpop.permute.xlu0 %522
  %525 = vset.pattern.permute.xlu0 2
  %526 = vperm.xlu0 %525, %v40
  %v527 = vpop.permute.xlu0 %526
  %529 = vset.pattern.permute.xlu0 2
  %530 = vperm.xlu0 %529, %v41
  %v531 = vpop.permute.xlu0 %530
  %533 = vset.pattern.permute.xlu0 2
  %534 = vperm.xlu0 %533, %v42
  %v535 = vpop.permute.xlu0 %534
  %537 = vset.pattern.permute.xlu0 2
  %538 = vperm.xlu0 %537, %v43
  %v539 = vpop.permute.xlu0 %538
  %541 = vset.pattern.permute.xlu0 2
  %542 = vperm.xlu0 %541, %v44
  %v543 = vpop.permute.xlu0 %542
  %545 = vset.pattern.permute.xlu0 2
  %546 = vperm.xlu0 %545, %v45
  %v547 = vpop.permute.xlu0 %546
  %549 = vset.pattern.permute.xlu0 2
  %550 = vperm.xlu0 %549, %v46
  %v551 = vpop.permute.xlu0 %550
  %553 = vset.pattern.permute.xlu0 2
  %554 = vperm.xlu0 %553, %v47
  %v555 = vpop.permute.xlu0 %554
  %557 = vset.pattern.permute.xlu0 2
  %558 = vperm.xlu0 %557, %v48
  %v559 = vpop.permute.xlu0 %558
  %561 = vset.pattern.permute.xlu0 2
  %562 = vperm.xlu0 %561, %v49
  %v563 = vpop.permute.xlu0 %562
  %565 = vset.pattern.permute.xlu0 2
  %566 = vperm.xlu0 %565, %v50
  %v567 = vpop.permute.xlu0 %566
  %569 = vset.pattern.permute.xlu0 2
  %570 = vperm.xlu0 %569, %v51
  %v571 = vpop.permute.xlu0 %570
  %573 = vset.pattern.permute.xlu0 2
  %574 = vperm.xlu0 %573, %v52
  %v575 = vpop.permute.xlu0 %574
  %577 = vset.pattern.permute.xlu0 2
  %578 = vperm.xlu0 %577, %v53
  %v579 = vpop.permute.xlu0 %578
  %581 = vset.pattern.permute.xlu0 2
  %582 = vperm.xlu0 %581, %v54
  %v583 = vpop.permute.xlu0 %582
  %585 = vset.pattern.permute.xlu0 2
  %586 = vperm.xlu0 %585, %v55
  %v587 = vpop.permute.xlu0 %586
  %589 = vset.pattern.permute.xlu0 2
  %590 = vperm.xlu0 %589, %v56
  %v591 = vpop.permute.xlu0 %590
  %593 = vset.pattern.permute.xlu0 2
  %594 = vperm.xlu0 %593, %v57
  %v595 = vpop.permute.xlu0 %594
  %597 = vset.pattern.permute.xlu0 2
  %598 = vperm.xlu0 %597, %v58
  %v599 = vpop.permute.xlu0 %598
  %601 = vset.pattern.permute.xlu0 2
  %602 = vperm.xlu0 %601, %v59
  %v603 = vpop.permute.xlu0 %602
  %605 = vset.pattern.permute.xlu0 2
  %606 = vperm.xlu0 %605, %v60
  %v607 = vpop.permute.xlu0 %606
  %609 = vset.pattern.permute.xlu0 2
  %610 = vperm.xlu0 %609, %v61
  %v611 = vpop.permute.xlu0 %610
  %613 = vset.pattern.permute.xlu0 2
  %614 = vperm.xlu0 %613, %v62
  %v615 = vpop.permute.xlu0 %614
  %617 = vset.pattern.permute.xlu0 2
  %618 = vperm.xlu0 %617, %v63
  %v619 = vpop.permute.xlu0 %618
  %621 = vset.pattern.permute.xlu0 2
  %622 = vperm.xlu0 %621, %v64
  %v623 = vpop.permute.xlu0 %622
  %v625 = vlaneseq
  %v626 = vshrl.u32 %v625, 7
  %v627 = vsub.s32 2, %v626
  %v628 = vrot.slane %v65, %v627
  %v629 = vmul.f32 %v499, %v628
  %v630 = vmul.f32 %v503, %v628
  %v631 = vmul.f32 %v507, %v628
  %v632 = vmul.f32 %v511, %v628
  %v633 = vmul.f32 %v515, %v628
  %v634 = vmul.f32 %v519, %v628
  %v635 = vmul.f32 %v523, %v628
  %v636 = vmul.f32 %v527, %v628
  %v637 = vmul.f32 %v531, %v628
  %v638 = vmul.f32 %v535, %v628
  %v639 = vmul.f32 %v539, %v628
  %v640 = vmul.f32 %v543, %v628
  %v641 = vmul.f32 %v547, %v628
  %v642 = vmul.f32 %v551, %v628
  %v643 = vmul.f32 %v555, %v628
  %v644 = vmul.f32 %v559, %v628
  %v645 = vmul.f32 %v563, %v628
  %v646 = vmul.f32 %v567, %v628
  %v647 = vmul.f32 %v571, %v628
  %v648 = vmul.f32 %v575, %v628
  %v649 = vmul.f32 %v579, %v628
  %v650 = vmul.f32 %v583, %v628
  %v651 = vmul.f32 %v587, %v628
  %v652 = vmul.f32 %v591, %v628
  %v653 = vmul.f32 %v595, %v628
  %v654 = vmul.f32 %v599, %v628
  %v655 = vmul.f32 %v603, %v628
  %v656 = vmul.f32 %v607, %v628
  %v657 = vmul.f32 %v611, %v628
  %v658 = vmul.f32 %v615, %v628
  %v659 = vmul.f32 %v619, %v628
  %v660 = vmul.f32 %v623, %v628
  %v661 = vadd.f32 %v465, %v629
  %v662 = vadd.f32 %v466, %v630
  %v663 = vadd.f32 %v467, %v631
  %v664 = vadd.f32 %v468, %v632
  %v665 = vadd.f32 %v469, %v633
  %v666 = vadd.f32 %v470, %v634
  %v667 = vadd.f32 %v471, %v635
  %v668 = vadd.f32 %v472, %v636
  %v669 = vadd.f32 %v473, %v637
  %v670 = vadd.f32 %v474, %v638
  %v671 = vadd.f32 %v475, %v639
  %v672 = vadd.f32 %v476, %v640
  %v673 = vadd.f32 %v477, %v641
  %v674 = vadd.f32 %v478, %v642
  %v675 = vadd.f32 %v479, %v643
  %v676 = vadd.f32 %v480, %v644
  %v677 = vadd.f32 %v481, %v645
  %v678 = vadd.f32 %v482, %v646
  %v679 = vadd.f32 %v483, %v647
  %v680 = vadd.f32 %v484, %v648
  %v681 = vadd.f32 %v485, %v649
  %v682 = vadd.f32 %v486, %v650
  %v683 = vadd.f32 %v487, %v651
  %v684 = vadd.f32 %v488, %v652
  %v685 = vadd.f32 %v489, %v653
  %v686 = vadd.f32 %v490, %v654
  %v687 = vadd.f32 %v491, %v655
  %v688 = vadd.f32 %v492, %v656
  %v689 = vadd.f32 %v493, %v657
  %v690 = vadd.f32 %v494, %v658
  %v691 = vadd.f32 %v495, %v659
  %v692 = vadd.f32 %v496, %v660
  %693 = vset.pattern.permute.xlu0 3
  %694 = vperm.xlu0 %693, %v33
  %v695 = vpop.permute.xlu0 %694
  %697 = vset.pattern.permute.xlu0 3
  %698 = vperm.xlu0 %697, %v34
  %v699 = vpop.permute.xlu0 %698
  %701 = vset.pattern.permute.xlu0 3
  %702 = vperm.xlu0 %701, %v35
  %v703 = vpop.permute.xlu0 %702
  %705 = vset.pattern.permute.xlu0 3
  %706 = vperm.xlu0 %705, %v36
  %v707 = vpop.permute.xlu0 %706
  %709 = vset.pattern.permute.xlu0 3
  %710 = vperm.xlu0 %709, %v37
  %v711 = vpop.permute.xlu0 %710
  %713 = vset.pattern.permute.xlu0 3
  %714 = vperm.xlu0 %713, %v38
  %v715 = vpop.permute.xlu0 %714
  %717 = vset.pattern.permute.xlu0 3
  %718 = vperm.xlu0 %717, %v39
  %v719 = vpop.permute.xlu0 %718
  %721 = vset.pattern.permute.xlu0 3
  %722 = vperm.xlu0 %721, %v40
  %v723 = vpop.permute.xlu0 %722
  %725 = vset.pattern.permute.xlu0 3
  %726 = vperm.xlu0 %725, %v41
  %v727 = vpop.permute.xlu0 %726
  %729 = vset.pattern.permute.xlu0 3
  %730 = vperm.xlu0 %729, %v42
  %v731 = vpop.permute.xlu0 %730
  %733 = vset.pattern.permute.xlu0 3
  %734 = vperm.xlu0 %733, %v43
  %v735 = vpop.permute.xlu0 %734
  %737 = vset.pattern.permute.xlu0 3
  %738 = vperm.xlu0 %737, %v44
  %v739 = vpop.permute.xlu0 %738
  %741 = vset.pattern.permute.xlu0 3
  %742 = vperm.xlu0 %741, %v45
  %v743 = vpop.permute.xlu0 %742
  %745 = vset.pattern.permute.xlu0 3
  %746 = vperm.xlu0 %745, %v46
  %v747 = vpop.permute.xlu0 %746
  %749 = vset.pattern.permute.xlu0 3
  %750 = vperm.xlu0 %749, %v47
  %v751 = vpop.permute.xlu0 %750
  %753 = vset.pattern.permute.xlu0 3
  %754 = vperm.xlu0 %753, %v48
  %v755 = vpop.permute.xlu0 %754
  %757 = vset.pattern.permute.xlu0 3
  %758 = vperm.xlu0 %757, %v49
  %v759 = vpop.permute.xlu0 %758
  %761 = vset.pattern.permute.xlu0 3
  %762 = vperm.xlu0 %761, %v50
  %v763 = vpop.permute.xlu0 %762
  %765 = vset.pattern.permute.xlu0 3
  %766 = vperm.xlu0 %765, %v51
  %v767 = vpop.permute.xlu0 %766
  %769 = vset.pattern.permute.xlu0 3
  %770 = vperm.xlu0 %769, %v52
  %v771 = vpop.permute.xlu0 %770
  %773 = vset.pattern.permute.xlu0 3
  %774 = vperm.xlu0 %773, %v53
  %v775 = vpop.permute.xlu0 %774
  %777 = vset.pattern.permute.xlu0 3
  %778 = vperm.xlu0 %777, %v54
  %v779 = vpop.permute.xlu0 %778
  %781 = vset.pattern.permute.xlu0 3
  %782 = vperm.xlu0 %781, %v55
  %v783 = vpop.permute.xlu0 %782
  %785 = vset.pattern.permute.xlu0 3
  %786 = vperm.xlu0 %785, %v56
  %v787 = vpop.permute.xlu0 %786
  %789 = vset.pattern.permute.xlu0 3
  %790 = vperm.xlu0 %789, %v57
  %v791 = vpop.permute.xlu0 %790
  %793 = vset.pattern.permute.xlu0 3
  %794 = vperm.xlu0 %793, %v58
  %v795 = vpop.permute.xlu0 %794
  %797 = vset.pattern.permute.xlu0 3
  %798 = vperm.xlu0 %797, %v59
  %v799 = vpop.permute.xlu0 %798
  %801 = vset.pattern.permute.xlu0 3
  %802 = vperm.xlu0 %801, %v60
  %v803 = vpop.permute.xlu0 %802
  %805 = vset.pattern.permute.xlu0 3
  %806 = vperm.xlu0 %805, %v61
  %v807 = vpop.permute.xlu0 %806
  %809 = vset.pattern.permute.xlu0 3
  %810 = vperm.xlu0 %809, %v62
  %v811 = vpop.permute.xlu0 %810
  %813 = vset.pattern.permute.xlu0 3
  %814 = vperm.xlu0 %813, %v63
  %v815 = vpop.permute.xlu0 %814
  %817 = vset.pattern.permute.xlu0 3
  %818 = vperm.xlu0 %817, %v64
  %v819 = vpop.permute.xlu0 %818
  %v821 = vlaneseq
  %v822 = vshrl.u32 %v821, 7
  %v823 = vsub.s32 3, %v822
  %v824 = vrot.slane %v65, %v823
  %v825 = vmul.f32 %v695, %v824
  %v826 = vmul.f32 %v699, %v824
  %v827 = vmul.f32 %v703, %v824
  %v828 = vmul.f32 %v707, %v824
  %v829 = vmul.f32 %v711, %v824
  %v830 = vmul.f32 %v715, %v824
  %v831 = vmul.f32 %v719, %v824
  %v832 = vmul.f32 %v723, %v824
  %v833 = vmul.f32 %v727, %v824
  %v834 = vmul.f32 %v731, %v824
  %v835 = vmul.f32 %v735, %v824
  %v836 = vmul.f32 %v739, %v824
  %v837 = vmul.f32 %v743, %v824
  %v838 = vmul.f32 %v747, %v824
  %v839 = vmul.f32 %v751, %v824
  %v840 = vmul.f32 %v755, %v824
  %v841 = vmul.f32 %v759, %v824
  %v842 = vmul.f32 %v763, %v824
  %v843 = vmul.f32 %v767, %v824
  %v844 = vmul.f32 %v771, %v824
  %v845 = vmul.f32 %v775, %v824
  %v846 = vmul.f32 %v779, %v824
  %v847 = vmul.f32 %v783, %v824
  %v848 = vmul.f32 %v787, %v824
  %v849 = vmul.f32 %v791, %v824
  %v850 = vmul.f32 %v795, %v824
  %v851 = vmul.f32 %v799, %v824
  %v852 = vmul.f32 %v803, %v824
  %v853 = vmul.f32 %v807, %v824
  %v854 = vmul.f32 %v811, %v824
  %v855 = vmul.f32 %v815, %v824
  %v856 = vmul.f32 %v819, %v824
  %v857 = vadd.f32 %v661, %v825
  %v858 = vadd.f32 %v662, %v826
  %v859 = vadd.f32 %v663, %v827
  %v860 = vadd.f32 %v664, %v828
  %v861 = vadd.f32 %v665, %v829
  %v862 = vadd.f32 %v666, %v830
  %v863 = vadd.f32 %v667, %v831
  %v864 = vadd.f32 %v668, %v832
  %v865 = vadd.f32 %v669, %v833
  %v866 = vadd.f32 %v670, %v834
  %v867 = vadd.f32 %v671, %v835
  %v868 = vadd.f32 %v672, %v836
  %v869 = vadd.f32 %v673, %v837
  %v870 = vadd.f32 %v674, %v838
  %v871 = vadd.f32 %v675, %v839
  %v872 = vadd.f32 %v676, %v840
  %v873 = vadd.f32 %v677, %v841
  %v874 = vadd.f32 %v678, %v842
  %v875 = vadd.f32 %v679, %v843
  %v876 = vadd.f32 %v680, %v844
  %v877 = vadd.f32 %v681, %v845
  %v878 = vadd.f32 %v682, %v846
  %v879 = vadd.f32 %v683, %v847
  %v880 = vadd.f32 %v684, %v848
  %v881 = vadd.f32 %v685, %v849
  %v882 = vadd.f32 %v686, %v850
  %v883 = vadd.f32 %v687, %v851
  %v884 = vadd.f32 %v688, %v852
  %v885 = vadd.f32 %v689, %v853
  %v886 = vadd.f32 %v690, %v854
  %v887 = vadd.f32 %v691, %v855
  %v888 = vadd.f32 %v692, %v856
  %v889 = vmax.f32 %v857, 0.0
  %v890 = vmax.f32 %v858, 0.0
  %v891 = vmax.f32 %v859, 0.0
  %v892 = vmax.f32 %v860, 0.0
  %v893 = vmax.f32 %v861, 0.0
  %v894 = vmax.f32 %v862, 0.0
  %v895 = vmax.f32 %v863, 0.0
  %v896 = vmax.f32 %v864, 0.0
  %v897 = vmax.f32 %v865, 0.0
  %v898 = vmax.f32 %v866, 0.0
  %v899 = vmax.f32 %v867, 0.0
  %v900 = vmax.f32 %v868, 0.0
  %v901 = vmax.f32 %v869, 0.0
  %v902 = vmax.f32 %v870, 0.0
  %v903 = vmax.f32 %v871, 0.0
  %v904 = vmax.f32 %v872, 0.0
  %v905 = vmax.f32 %v873, 0.0
  %v906 = vmax.f32 %v874, 0.0
  %v907 = vmax.f32 %v875, 0.0
  %v908 = vmax.f32 %v876, 0.0
  %v909 = vmax.f32 %v877, 0.0
  %v910 = vmax.f32 %v878, 0.0
  %v911 = vmax.f32 %v879, 0.0
  %v912 = vmax.f32 %v880, 0.0
  %v913 = vmax.f32 %v881, 0.0
  %v914 = vmax.f32 %v882, 0.0
  %v915 = vmax.f32 %v883, 0.0
  %v916 = vmax.f32 %v884, 0.0
  %v917 = vmax.f32 %v885, 0.0
  %v918 = vmax.f32 %v886, 0.0
  %v919 = vmax.f32 %v887, 0.0
  %v920 = vmax.f32 %v888, 0.0
  %v921 = vpack.c.bf16 %v890, %v889
  %v922 = vpack.c.bf16 %v892, %v891
  %v923 = vpack.c.bf16 %v894, %v893
  %v924 = vpack.c.bf16 %v896, %v895
  %v925 = vpack.c.bf16 %v898, %v897
  %v926 = vpack.c.bf16 %v900, %v899
  %v927 = vpack.c.bf16 %v902, %v901
  %v928 = vpack.c.bf16 %v904, %v903
  %v929 = vpack.c.bf16 %v906, %v905
  %v930 = vpack.c.bf16 %v908, %v907
  %v931 = vpack.c.bf16 %v910, %v909
  %v932 = vpack.c.bf16 %v912, %v911
  %v933 = vpack.c.bf16 %v914, %v913
  %v934 = vpack.c.bf16 %v916, %v915
  %v935 = vpack.c.bf16 %v918, %v917
  %v936 = vpack.c.bf16 %v920, %v919
  %v937 = vld [vmem:[%s3] sm:$0xff]
  %v938 = vld [vmem:[%s3 + $0x8] sm:$0xff]
  %v939 = vld [vmem:[%s3 + $0x10] sm:$0xff]
  %v940 = vld [vmem:[%s3 + $0x18] sm:$0xff]
  %v941 = vld [vmem:[%s3 + $0x20] sm:$0xff]
  %v942 = vld [vmem:[%s3 + $0x28] sm:$0xff]
  %v943 = vld [vmem:[%s3 + $0x30] sm:$0xff]
  %v944 = vld [vmem:[%s3 + $0x38] sm:$0xff]
  %v945 = vld [vmem:[%s3 + $0x40] sm:$0xff]
  %v946 = vld [vmem:[%s3 + $0x48] sm:$0xff]
  %v947 = vld [vmem:[%s3 + $0x50] sm:$0xff]
  %v948 = vld [vmem:[%s3 + $0x58] sm:$0xff]
  %v949 = vld [vmem:[%s3 + $0x60] sm:$0xff]
  %v950 = vld [vmem:[%s3 + $0x68] sm:$0xff]
  %v951 = vld [vmem:[%s3 + $0x70] sm:$0xff]
  %v952 = vld [vmem:[%s3 + $0x78] sm:$0xff]
  %v953 = vld [vmem:[%s4] sm:$0x3]
  %v955 = vlaneseq
  %v956 = vshrl.u32 %v955, 7
  %v957 = vsub.s32 0, %v956
  %v958 = vrot.slane %v953, %v957
  %v959 = vlaneseq
  %v960 = vshrl.u32 %v959, 7
  %v961 = vsub.s32 1, %v960
  %v962 = vrot.slane %v953, %v961
  %v981 = vunpack.c.l.b16 %v937
  %v982 = vunpack.c.h.b16 %v937
  %v983 = vunpack.c.l.b16 %v938
  %v984 = vunpack.c.h.b16 %v938
  %v985 = vunpack.c.l.b16 %v939
  %v986 = vunpack.c.h.b16 %v939
  %v987 = vunpack.c.l.b16 %v940
  %v988 = vunpack.c.h.b16 %v940
  %v989 = vunpack.c.l.b16 %v941
  %v990 = vunpack.c.h.b16 %v941
  %v991 = vunpack.c.l.b16 %v942
  %v992 = vunpack.c.h.b16 %v942
  %v993 = vunpack.c.l.b16 %v943
  %v994 = vunpack.c.h.b16 %v943
  %v995 = vunpack.c.l.b16 %v944
  %v996 = vunpack.c.h.b16 %v944
  %v997 = vunpack.c.l.b16 %v945
  %v998 = vunpack.c.h.b16 %v945
  %v999 = vunpack.c.l.b16 %v946
  %v1000 = vunpack.c.h.b16 %v946
  %v1001 = vunpack.c.l.b16 %v947
  %v1002 = vunpack.c.h.b16 %v947
  %v1003 = vunpack.c.l.b16 %v948
  %v1004 = vunpack.c.h.b16 %v948
  %v1005 = vunpack.c.l.b16 %v949
  %v1006 = vunpack.c.h.b16 %v949
  %v1007 = vunpack.c.l.b16 %v950
  %v1008 = vunpack.c.h.b16 %v950
  %v1009 = vunpack.c.l.b16 %v951
  %v1010 = vunpack.c.h.b16 %v951
  %v1011 = vunpack.c.l.b16 %v952
  %v1012 = vunpack.c.h.b16 %v952
  %v1013 = vpack.c.b16 %v983, %v981
  %v1014 = vpack.c.b16 %v984, %v982
  %v1015 = vpack.c.b16 %v987, %v985
  %v1016 = vpack.c.b16 %v988, %v986
  %v1017 = vpack.c.b16 %v991, %v989
  %v1018 = vpack.c.b16 %v992, %v990
  %v1019 = vpack.c.b16 %v995, %v993
  %v1020 = vpack.c.b16 %v996, %v994
  %v1021 = vpack.c.b16 %v999, %v997
  %v1022 = vpack.c.b16 %v1000, %v998
  %v1023 = vpack.c.b16 %v1003, %v1001
  %v1024 = vpack.c.b16 %v1004, %v1002
  %v1025 = vpack.c.b16 %v1007, %v1005
  %v1026 = vpack.c.b16 %v1008, %v1006
  %v1027 = vpack.c.b16 %v1011, %v1009
  %v1028 = vpack.c.b16 %v1012, %v1010
  %1045 = vmatprep.subr.bf16.mxu0 %v1014
  %1046 = vmatpush1.bf16.msra.mxu0 %v1013
  %1047 = vmatprep.subr.bf16.mxu0 %v1016
  %1048 = vmatpush1.bf16.msra.mxu0 %v1015
  %1049 = vmatprep.subr.bf16.mxu0 %v1018
  %1050 = vmatpush1.bf16.msra.mxu0 %v1017
  %1051 = vmatprep.subr.bf16.mxu0 %v1020
  %1052 = vmatpush1.bf16.msra.mxu0 %v1019
  %1053 = vmatprep.subr.bf16.mxu0 %v1022
  %1054 = vmatpush1.bf16.msra.mxu0 %v1021
  %1055 = vmatprep.subr.bf16.mxu0 %v1024
  %1056 = vmatpush1.bf16.msra.mxu0 %v1023
  %1057 = vmatprep.subr.bf16.mxu0 %v1026
  %1058 = vmatpush1.bf16.msra.mxu0 %v1025
  %1059 = vmatprep.subr.bf16.mxu0 %v1028
  %1060 = vmatpush1.bf16.msra.mxu0 %v1027
  %1061 = vmatprep.subr.bf16.mxu0 0
  %1062 = vmatpush1.bf16.msra.mxu0 0
  %1063 = vmatprep.subr.bf16.mxu0 0
  %1064 = vmatpush1.bf16.msra.mxu0 0
  %1065 = vmatprep.subr.bf16.mxu0 0
  %1066 = vmatpush1.bf16.msra.mxu0 0
  %1067 = vmatprep.subr.bf16.mxu0 0
  %1068 = vmatpush1.bf16.msra.mxu0 0
  %1069 = vmatprep.subr.bf16.mxu0 0
  %1070 = vmatpush1.bf16.msra.mxu0 0
  %1071 = vmatprep.subr.bf16.mxu0 0
  %1072 = vmatpush1.bf16.msra.mxu0 0
  %1073 = vmatprep.subr.bf16.mxu0 0
  %1074 = vmatpush1.bf16.msra.mxu0 0
  %1075 = vmatprep.subr.bf16.mxu0 0
  %1076 = vmatpush1.bf16.msra.mxu0 0
  %1077 = vmatprep.mubr.bf16.mxu0 0
  %1078 = vmatmul.mubr.bf16.gmra.mrb[0].mxu0 %v921
  %v1079 = vpop.f32.mrb[0].mxu0
  %v1080 = vadd.f32 %v958, %v1079
  %v1081 = vpop.f32.mrb[0].mxu0
  %v1082 = vadd.f32 %v962, %v1081
  %v1083 = vpop.f32.mrb[0].mxu0
  %v1084 = vadd.f32 %v958, %v1083
  %v1085 = vpop.f32.mrb[0].mxu0
  %v1086 = vadd.f32 %v962, %v1085
  %1087 = vmatprep.mubr.bf16.mxu0 0
  %1088 = vmatmul.mubr.bf16.gmra.mrb[0].mxu0 %v922
  %v1089 = vpop.f32.mrb[0].mxu0
  %v1090 = vadd.f32 %v958, %v1089
  %v1091 = vpop.f32.mrb[0].mxu0
  %v1092 = vadd.f32 %v962, %v1091
  %v1093 = vpop.f32.mrb[0].mxu0
  %v1094 = vadd.f32 %v958, %v1093
  %v1095 = vpop.f32.mrb[0].mxu0
  %v1096 = vadd.f32 %v962, %v1095
  %1097 = vmatprep.mubr.bf16.mxu0 0
  %1098 = vmatmul.mubr.bf16.gmra.mrb[0].mxu0 %v923
  %v1099 = vpop.f32.mrb[0].mxu0
  %v1100 = vadd.f32 %v958, %v1099
  %v1101 = vpop.f32.mrb[0].mxu0
  %v1102 = vadd.f32 %v962, %v1101
  %v1103 = vpop.f32.mrb[0].mxu0
  %v1104 = vadd.f32 %v958, %v1103
  %v1105 = vpop.f32.mrb[0].mxu0
  %v1106 = vadd.f32 %v962, %v1105
  %1107 = vmatprep.mubr.bf16.mxu0 0
  %1108 = vmatmul.mubr.bf16.gmra.mrb[0].mxu0 %v924
  %v1109 = vpop.f32.mrb[0].mxu0
  %v1110 = vadd.f32 %v958, %v1109
  %v1111 = vpop.f32.mrb[0].mxu0
  %v1112 = vadd.f32 %v962, %v1111
  %v1113 = vpop.f32.mrb[0].mxu0
  %v1114 = vadd.f32 %v958, %v1113
  %v1115 = vpop.f32.mrb[0].mxu0
  %v1116 = vadd.f32 %v962, %v1115
  %1117 = vmatprep.mubr.bf16.mxu0 0
  %1118 = vmatmul.mubr.bf16.gmra.mrb[0].mxu0 %v925
  %v1119 = vpop.f32.mrb[0].mxu0
  %v1120 = vadd.f32 %v958, %v1119
  %v1121 = vpop.f32.mrb[0].mxu0
  %v1122 = vadd.f32 %v962, %v1121
  %v1123 = vpop.f32.mrb[0].mxu0
  %v1124 = vadd.f32 %v958, %v1123
  %v1125 = vpop.f32.mrb[0].mxu0
  %v1126 = vadd.f32 %v962, %v1125
  %1127 = vmatprep.mubr.bf16.mxu0 0
  %1128 = vmatmul.mubr.bf16.gmra.mrb[0].mxu0 %v926
  %v1129 = vpop.f32.mrb[0].mxu0
  %v1130 = vadd.f32 %v958, %v1129
  %v1131 = vpop.f32.mrb[0].mxu0
  %v1132 = vadd.f32 %v962, %v1131
  %v1133 = vpop.f32.mrb[0].mxu0
  %v1134 = vadd.f32 %v958, %v1133
  %v1135 = vpop.f32.mrb[0].mxu0
  %v1136 = vadd.f32 %v962, %v1135
  %1137 = vmatprep.mubr.bf16.mxu0 0
  %1138 = vmatmul.mubr.bf16.gmra.mrb[0].mxu0 %v927
  %v1139 = vpop.f32.mrb[0].mxu0
  %v1140 = vadd.f32 %v958, %v1139
  %v1141 = vpop.f32.mrb[0].mxu0
  %v1142 = vadd.f32 %v962, %v1141
  %v1143 = vpop.f32.mrb[0].mxu0
  %v1144 = vadd.f32 %v958, %v1143
  %v1145 = vpop.f32.mrb[0].mxu0
  %v1146 = vadd.f32 %v962, %v1145
  %1147 = vmatprep.mubr.bf16.mxu0 0
  %1148 = vmatmul.mubr.bf16.gmra.mrb[0].mxu0 %v928
  %v1149 = vpop.f32.mrb[0].mxu0
  %v1150 = vadd.f32 %v958, %v1149
  %v1151 = vpop.f32.mrb[0].mxu0
  %v1152 = vadd.f32 %v962, %v1151
  %v1153 = vpop.f32.mrb[0].mxu0
  %v1154 = vadd.f32 %v958, %v1153
  %v1155 = vpop.f32.mrb[0].mxu0
  %v1156 = vadd.f32 %v962, %v1155
  %1157 = vmatprep.mubr.bf16.mxu0 0
  %1158 = vmatmul.mubr.bf16.gmra.mrb[0].mxu0 %v929
  %v1159 = vpop.f32.mrb[0].mxu0
  %v1160 = vadd.f32 %v958, %v1159
  %v1161 = vpop.f32.mrb[0].mxu0
  %v1162 = vadd.f32 %v962, %v1161
  %v1163 = vpop.f32.mrb[0].mxu0
  %v1164 = vadd.f32 %v958, %v1163
  %v1165 = vpop.f32.mrb[0].mxu0
  %v1166 = vadd.f32 %v962, %v1165
  %1167 = vmatprep.mubr.bf16.mxu0 0
  %1168 = vmatmul.mubr.bf16.gmra.mrb[0].mxu0 %v930
  %v1169 = vpop.f32.mrb[0].mxu0
  %v1170 = vadd.f32 %v958, %v1169
  %v1171 = vpop.f32.mrb[0].mxu0
  %v1172 = vadd.f32 %v962, %v1171
  %v1173 = vpop.f32.mrb[0].mxu0
  %v1174 = vadd.f32 %v958, %v1173
  %v1175 = vpop.f32.mrb[0].mxu0
  %v1176 = vadd.f32 %v962, %v1175
  %1177 = vmatprep.mubr.bf16.mxu0 0
  %1178 = vmatmul.mubr.bf16.gmra.mrb[0].mxu0 %v931
  %v1179 = vpop.f32.mrb[0].mxu0
  %v1180 = vadd.f32 %v958, %v1179
  %v1181 = vpop.f32.mrb[0].mxu0
  %v1182 = vadd.f32 %v962, %v1181
  %v1183 = vpop.f32.mrb[0].mxu0
  %v1184 = vadd.f32 %v958, %v1183
  %v1185 = vpop.f32.mrb[0].mxu0
  %v1186 = vadd.f32 %v962, %v1185
  %1187 = vmatprep.mubr.bf16.mxu0 0
  %1188 = vmatmul.mubr.bf16.gmra.mrb[0].mxu0 %v932
  %v1189 = vpop.f32.mrb[0].mxu0
  %v1190 = vadd.f32 %v958, %v1189
  %v1191 = vpop.f32.mrb[0].mxu0
  %v1192 = vadd.f32 %v962, %v1191
  %v1193 = vpop.f32.mrb[0].mxu0
  %v1194 = vadd.f32 %v958, %v1193
  %v1195 = vpop.f32.mrb[0].mxu0
  %v1196 = vadd.f32 %v962, %v1195
  %1197 = vmatprep.mubr.bf16.mxu0 0
  %1198 = vmatmul.mubr.bf16.gmra.mrb[0].mxu0 %v933
  %v1199 = vpop.f32.mrb[0].mxu0
  %v1200 = vadd.f32 %v958, %v1199
  %v1201 = vpop.f32.mrb[0].mxu0
  %v1202 = vadd.f32 %v962, %v1201
  %v1203 = vpop.f32.mrb[0].mxu0
  %v1204 = vadd.f32 %v958, %v1203
  %v1205 = vpop.f32.mrb[0].mxu0
  %v1206 = vadd.f32 %v962, %v1205
  %1207 = vmatprep.mubr.bf16.mxu0 0
  %1208 = vmatmul.mubr.bf16.gmra.mrb[0].mxu0 %v934
  %v1209 = vpop.f32.mrb[0].mxu0
  %v1210 = vadd.f32 %v958, %v1209
  %v1211 = vpop.f32.mrb[0].mxu0
  %v1212 = vadd.f32 %v962, %v1211
  %v1213 = vpop.f32.mrb[0].mxu0
  %v1214 = vadd.f32 %v958, %v1213
  %v1215 = vpop.f32.mrb[0].mxu0
  %v1216 = vadd.f32 %v962, %v1215
  %1217 = vmatprep.mubr.bf16.mxu0 0
  %1218 = vmatmul.mubr.bf16.gmra.mrb[0].mxu0 %v935
  %v1219 = vpop.f32.mrb[0].mxu0
  %v1220 = vadd.f32 %v958, %v1219
  %v1221 = vpop.f32.mrb[0].mxu0
  %v1222 = vadd.f32 %v962, %v1221
  %v1223 = vpop.f32.mrb[0].mxu0
  %v1224 = vadd.f32 %v958, %v1223
  %v1225 = vpop.f32.mrb[0].mxu0
  %v1226 = vadd.f32 %v962, %v1225
  %1227 = vmatprep.mubr.bf16.mxu0 0
  %1228 = vmatmul.mubr.bf16.gmra.mrb[0].mxu0 %v936
  %v1229 = vpop.f32.mrb[0].mxu0
  %v1230 = vadd.f32 %v958, %v1229
  %v1231 = vpop.f32.mrb[0].mxu0
  %v1232 = vadd.f32 %v962, %v1231
  %v1233 = vpop.f32.mrb[0].mxu0
  %v1234 = vadd.f32 %v958, %v1233
  %v1235 = vpop.f32.mrb[0].mxu0
  %v1236 = vadd.f32 %v962, %v1235
  %1237 = vdwg.mxu0
  %v1238 = vmax.f32 %v1080, 0.0
  %v1239 = vmax.f32 %v1082, 0.0
  %v1240 = vmax.f32 %v1084, 0.0
  %v1241 = vmax.f32 %v1086, 0.0
  %v1242 = vmax.f32 %v1090, 0.0
  %v1243 = vmax.f32 %v1092, 0.0
  %v1244 = vmax.f32 %v1094, 0.0
  %v1245 = vmax.f32 %v1096, 0.0
  %v1246 = vmax.f32 %v1100, 0.0
  %v1247 = vmax.f32 %v1102, 0.0
  %v1248 = vmax.f32 %v1104, 0.0
  %v1249 = vmax.f32 %v1106, 0.0
  %v1250 = vmax.f32 %v1110, 0.0
  %v1251 = vmax.f32 %v1112, 0.0
  %v1252 = vmax.f32 %v1114, 0.0
  %v1253 = vmax.f32 %v1116, 0.0
  %v1254 = vmax.f32 %v1120, 0.0
  %v1255 = vmax.f32 %v1122, 0.0
  %v1256 = vmax.f32 %v1124, 0.0
  %v1257 = vmax.f32 %v1126, 0.0
  %v1258 = vmax.f32 %v1130, 0.0
  %v1259 = vmax.f32 %v1132, 0.0
  %v1260 = vmax.f32 %v1134, 0.0
  %v1261 = vmax.f32 %v1136, 0.0
  %v1262 = vmax.f32 %v1140, 0.0
  %v1263 = vmax.f32 %v1142, 0.0
  %v1264 = vmax.f32 %v1144, 0.0
  %v1265 = vmax.f32 %v1146, 0.0
  %v1266 = vmax.f32 %v1150, 0.0
  %v1267 = vmax.f32 %v1152, 0.0
  %v1268 = vmax.f32 %v1154, 0.0
  %v1269 = vmax.f32 %v1156, 0.0
  %v1270 = vmax.f32 %v1160, 0.0
  %v1271 = vmax.f32 %v1162, 0.0
  %v1272 = vmax.f32 %v1164, 0.0
  %v1273 = vmax.f32 %v1166, 0.0
  %v1274 = vmax.f32 %v1170, 0.0
  %v1275 = vmax.f32 %v1172, 0.0
  %v1276 = vmax.f32 %v1174, 0.0
  %v1277 = vmax.f32 %v1176, 0.0
  %v1278 = vmax.f32 %v1180, 0.0
  %v1279 = vmax.f32 %v1182, 0.0
  %v1280 = vmax.f32 %v1184, 0.0
  %v1281 = vmax.f32 %v1186, 0.0
  %v1282 = vmax.f32 %v1190, 0.0
  %v1283 = vmax.f32 %v1192, 0.0
  %v1284 = vmax.f32 %v1194, 0.0
  %v1285 = vmax.f32 %v1196, 0.0
  %v1286 = vmax.f32 %v1200, 0.0
  %v1287 = vmax.f32 %v1202, 0.0
  %v1288 = vmax.f32 %v1204, 0.0
  %v1289 = vmax.f32 %v1206, 0.0
  %v1290 = vmax.f32 %v1210, 0.0
  %v1291 = vmax.f32 %v1212, 0.0
  %v1292 = vmax.f32 %v1214, 0.0
  %v1293 = vmax.f32 %v1216, 0.0
  %v1294 = vmax.f32 %v1220, 0.0
  %v1295 = vmax.f32 %v1222, 0.0
  %v1296 = vmax.f32 %v1224, 0.0
  %v1297 = vmax.f32 %v1226, 0.0
  %v1298 = vmax.f32 %v1230, 0.0
  %v1299 = vmax.f32 %v1232, 0.0
  %v1300 = vmax.f32 %v1234, 0.0
  %v1301 = vmax.f32 %v1236, 0.0
  %v1302 = vpack.c.bf16 %v1240, %v1238
  %v1303 = vpack.c.bf16 %v1241, %v1239
  %v1304 = vpack.c.bf16 %v1244, %v1242
  %v1305 = vpack.c.bf16 %v1245, %v1243
  %v1306 = vpack.c.bf16 %v1248, %v1246
  %v1307 = vpack.c.bf16 %v1249, %v1247
  %v1308 = vpack.c.bf16 %v1252, %v1250
  %v1309 = vpack.c.bf16 %v1253, %v1251
  %v1310 = vpack.c.bf16 %v1256, %v1254
  %v1311 = vpack.c.bf16 %v1257, %v1255
  %v1312 = vpack.c.bf16 %v1260, %v1258
  %v1313 = vpack.c.bf16 %v1261, %v1259
  %v1314 = vpack.c.bf16 %v1264, %v1262
  %v1315 = vpack.c.bf16 %v1265, %v1263
  %v1316 = vpack.c.bf16 %v1268, %v1266
  %v1317 = vpack.c.bf16 %v1269, %v1267
  %v1318 = vpack.c.bf16 %v1272, %v1270
  %v1319 = vpack.c.bf16 %v1273, %v1271
  %v1320 = vpack.c.bf16 %v1276, %v1274
  %v1321 = vpack.c.bf16 %v1277, %v1275
  %v1322 = vpack.c.bf16 %v1280, %v1278
  %v1323 = vpack.c.bf16 %v1281, %v1279
  %v1324 = vpack.c.bf16 %v1284, %v1282
  %v1325 = vpack.c.bf16 %v1285, %v1283
  %v1326 = vpack.c.bf16 %v1288, %v1286
  %v1327 = vpack.c.bf16 %v1289, %v1287
  %v1328 = vpack.c.bf16 %v1292, %v1290
  %v1329 = vpack.c.bf16 %v1293, %v1291
  %v1330 = vpack.c.bf16 %v1296, %v1294
  %v1331 = vpack.c.bf16 %v1297, %v1295
  %v1332 = vpack.c.bf16 %v1300, %v1298
  %v1333 = vpack.c.bf16 %v1301, %v1299
  %v1334 = vld [vmem:[%s5] sm:$0xff]
  %v1335 = vld [vmem:[%s5 + $0x8] sm:$0xff]
  %v1336 = vld [vmem:[%s5 + $0x10] sm:$0xff]
  %v1337 = vld [vmem:[%s5 + $0x18] sm:$0xff]
  %v1338 = vld [vmem:[%s5 + $0x20] sm:$0xff]
  %v1339 = vld [vmem:[%s5 + $0x28] sm:$0xff]
  %v1340 = vld [vmem:[%s5 + $0x30] sm:$0xff]
  %v1341 = vld [vmem:[%s5 + $0x38] sm:$0xff]
  %v1342 = vld [vmem:[%s5 + $0x40] sm:$0xff]
  %v1343 = vld [vmem:[%s5 + $0x48] sm:$0xff]
  %v1344 = vld [vmem:[%s5 + $0x50] sm:$0xff]
  %v1345 = vld [vmem:[%s5 + $0x58] sm:$0xff]
  %v1346 = vld [vmem:[%s5 + $0x60] sm:$0xff]
  %v1347 = vld [vmem:[%s5 + $0x68] sm:$0xff]
  %v1348 = vld [vmem:[%s5 + $0x70] sm:$0xff]
  %v1349 = vld [vmem:[%s5 + $0x78] sm:$0xff]
  %v1350 = vld [vmem:[%s5 + $0x80] sm:$0xff]
  %v1351 = vld [vmem:[%s5 + $0x88] sm:$0xff]
  %v1352 = vld [vmem:[%s5 + $0x90] sm:$0xff]
  %v1353 = vld [vmem:[%s5 + $0x98] sm:$0xff]
  %v1354 = vld [vmem:[%s5 + $0xa0] sm:$0xff]
  %v1355 = vld [vmem:[%s5 + $0xa8] sm:$0xff]
  %v1356 = vld [vmem:[%s5 + $0xb0] sm:$0xff]
  %v1357 = vld [vmem:[%s5 + $0xb8] sm:$0xff]
  %v1358 = vld [vmem:[%s5 + $0xc0] sm:$0xff]
  %v1359 = vld [vmem:[%s5 + $0xc8] sm:$0xff]
  %v1360 = vld [vmem:[%s5 + $0xd0] sm:$0xff]
  %v1361 = vld [vmem:[%s5 + $0xd8] sm:$0xff]
  %v1362 = vld [vmem:[%s5 + $0xe0] sm:$0xff]
  %v1363 = vld [vmem:[%s5 + $0xe8] sm:$0xff]
  %v1364 = vld [vmem:[%s5 + $0xf0] sm:$0xff]
  %v1365 = vld [vmem:[%s5 + $0xf8] sm:$0xff]
  %v1366 = vld [vmem:[%s6] sm:$0x3]
  %v1368 = vlaneseq
  %v1369 = vshrl.u32 %v1368, 7
  %v1370 = vsub.s32 0, %v1369
  %v1371 = vrot.slane %v1366, %v1370
  %v1372 = vlaneseq
  %v1373 = vshrl.u32 %v1372, 7
  %v1374 = vsub.s32 1, %v1373
  %v1375 = vrot.slane %v1366, %v1374
  %v1410 = vunpack.c.l.b16 %v1334
  %v1411 = vunpack.c.h.b16 %v1334
  %v1412 = vunpack.c.l.b16 %v1335
  %v1413 = vunpack.c.h.b16 %v1335
  %v1414 = vunpack.c.l.b16 %v1336
  %v1415 = vunpack.c.h.b16 %v1336
  %v1416 = vunpack.c.l.b16 %v1337
  %v1417 = vunpack.c.h.b16 %v1337
  %v1418 = vunpack.c.l.b16 %v1338
  %v1419 = vunpack.c.h.b16 %v1338
  %v1420 = vunpack.c.l.b16 %v1339
  %v1421 = vunpack.c.h.b16 %v1339
  %v1422 = vunpack.c.l.b16 %v1340
  %v1423 = vunpack.c.h.b16 %v1340
  %v1424 = vunpack.c.l.b16 %v1341
  %v1425 = vunpack.c.h.b16 %v1341
  %v1426 = vunpack.c.l.b16 %v1342
  %v1427 = vunpack.c.h.b16 %v1342
  %v1428 = vunpack.c.l.b16 %v1343
  %v1429 = vunpack.c.h.b16 %v1343
  %v1430 = vunpack.c.l.b16 %v1344
  %v1431 = vunpack.c.h.b16 %v1344
  %v1432 = vunpack.c.l.b16 %v1345
  %v1433 = vunpack.c.h.b16 %v1345
  %v1434 = vunpack.c.l.b16 %v1346
  %v1435 = vunpack.c.h.b16 %v1346
  %v1436 = vunpack.c.l.b16 %v1347
  %v1437 = vunpack.c.h.b16 %v1347
  %v1438 = vunpack.c.l.b16 %v1348
  %v1439 = vunpack.c.h.b16 %v1348
  %v1440 = vunpack.c.l.b16 %v1349
  %v1441 = vunpack.c.h.b16 %v1349
  %v1442 = vunpack.c.l.b16 %v1350
  %v1443 = vunpack.c.h.b16 %v1350
  %v1444 = vunpack.c.l.b16 %v1351
  %v1445 = vunpack.c.h.b16 %v1351
  %v1446 = vunpack.c.l.b16 %v1352
  %v1447 = vunpack.c.h.b16 %v1352
  %v1448 = vunpack.c.l.b16 %v1353
  %v1449 = vunpack.c.h.b16 %v1353
  %v1450 = vunpack.c.l.b16 %v1354
  %v1451 = vunpack.c.h.b16 %v1354
  %v1452 = vunpack.c.l.b16 %v1355
  %v1453 = vunpack.c.h.b16 %v1355
  %v1454 = vunpack.c.l.b16 %v1356
  %v1455 = vunpack.c.h.b16 %v1356
  %v1456 = vunpack.c.l.b16 %v1357
  %v1457 = vunpack.c.h.b16 %v1357
  %v1458 = vunpack.c.l.b16 %v1358
  %v1459 = vunpack.c.h.b16 %v1358
  %v1460 = vunpack.c.l.b16 %v1359
  %v1461 = vunpack.c.h.b16 %v1359
  %v1462 = vunpack.c.l.b16 %v1360
  %v1463 = vunpack.c.h.b16 %v1360
  %v1464 = vunpack.c.l.b16 %v1361
  %v1465 = vunpack.c.h.b16 %v1361
  %v1466 = vunpack.c.l.b16 %v1362
  %v1467 = vunpack.c.h.b16 %v1362
  %v1468 = vunpack.c.l.b16 %v1363
  %v1469 = vunpack.c.h.b16 %v1363
  %v1470 = vunpack.c.l.b16 %v1364
  %v1471 = vunpack.c.h.b16 %v1364
  %v1472 = vunpack.c.l.b16 %v1365
  %v1473 = vunpack.c.h.b16 %v1365
  %v1474 = vpack.c.b16 %v1412, %v1410
  %v1475 = vpack.c.b16 %v1413, %v1411
  %v1476 = vpack.c.b16 %v1416, %v1414
  %v1477 = vpack.c.b16 %v1417, %v1415
  %v1478 = vpack.c.b16 %v1420, %v1418
  %v1479 = vpack.c.b16 %v1421, %v1419
  %v1480 = vpack.c.b16 %v1424, %v1422
  %v1481 = vpack.c.b16 %v1425, %v1423
  %v1482 = vpack.c.b16 %v1428, %v1426
  %v1483 = vpack.c.b16 %v1429, %v1427
  %v1484 = vpack.c.b16 %v1432, %v1430
  %v1485 = vpack.c.b16 %v1433, %v1431
  %v1486 = vpack.c.b16 %v1436, %v1434
  %v1487 = vpack.c.b16 %v1437, %v1435
  %v1488 = vpack.c.b16 %v1440, %v1438
  %v1489 = vpack.c.b16 %v1441, %v1439
  %v1490 = vpack.c.b16 %v1444, %v1442
  %v1491 = vpack.c.b16 %v1445, %v1443
  %v1492 = vpack.c.b16 %v1448, %v1446
  %v1493 = vpack.c.b16 %v1449, %v1447
  %v1494 = vpack.c.b16 %v1452, %v1450
  %v1495 = vpack.c.b16 %v1453, %v1451
  %v1496 = vpack.c.b16 %v1456, %v1454
  %v1497 = vpack.c.b16 %v1457, %v1455
  %v1498 = vpack.c.b16 %v1460, %v1458
  %v1499 = vpack.c.b16 %v1461, %v1459
  %v1500 = vpack.c.b16 %v1464, %v1462
  %v1501 = vpack.c.b16 %v1465, %v1463
  %v1502 = vpack.c.b16 %v1468, %v1466
  %v1503 = vpack.c.b16 %v1469, %v1467
  %v1504 = vpack.c.b16 %v1472, %v1470
  %v1505 = vpack.c.b16 %v1473, %v1471
  %1538 = vmatprep.subr.bf16.mxu0 %v1475
  %1539 = vmatpush1.bf16.msra.mxu0 %v1474
  %1540 = vmatprep.subr.bf16.mxu0 %v1477
  %1541 = vmatpush1.bf16.msra.mxu0 %v1476
  %1542 = vmatprep.subr.bf16.mxu0 %v1479
  %1543 = vmatpush1.bf16.msra.mxu0 %v1478
  %1544 = vmatprep.subr.bf16.mxu0 %v1481
  %1545 = vmatpush1.bf16.msra.mxu0 %v1480
  %1546 = vmatprep.subr.bf16.mxu0 %v1483
  %1547 = vmatpush1.bf16.msra.mxu0 %v1482
  %1548 = vmatprep.subr.bf16.mxu0 %v1485
  %1549 = vmatpush1.bf16.msra.mxu0 %v1484
  %1550 = vmatprep.subr.bf16.mxu0 %v1487
  %1551 = vmatpush1.bf16.msra.mxu0 %v1486
  %1552 = vmatprep.subr.bf16.mxu0 %v1489
  %1553 = vmatpush1.bf16.msra.mxu0 %v1488
  %1554 = vmatprep.subr.bf16.mxu0 %v1491
  %1555 = vmatpush1.bf16.msra.mxu0 %v1490
  %1556 = vmatprep.subr.bf16.mxu0 %v1493
  %1557 = vmatpush1.bf16.msra.mxu0 %v1492
  %1558 = vmatprep.subr.bf16.mxu0 %v1495
  %1559 = vmatpush1.bf16.msra.mxu0 %v1494
  %1560 = vmatprep.subr.bf16.mxu0 %v1497
  %1561 = vmatpush1.bf16.msra.mxu0 %v1496
  %1562 = vmatprep.subr.bf16.mxu0 %v1499
  %1563 = vmatpush1.bf16.msra.mxu0 %v1498
  %1564 = vmatprep.subr.bf16.mxu0 %v1501
  %1565 = vmatpush1.bf16.msra.mxu0 %v1500
  %1566 = vmatprep.subr.bf16.mxu0 %v1503
  %1567 = vmatpush1.bf16.msra.mxu0 %v1502
  %1568 = vmatprep.subr.bf16.mxu0 %v1505
  %1569 = vmatpush1.bf16.msra.mxu0 %v1504
  %1570 = vmatprep.mubr.bf16.mxu0 %v1303
  %1571 = vmatmul.mubr.bf16.gmra.mrb[0].mxu0 %v1302
  %v1572 = vpop.f32.mrb[0].mxu0
  %v1573 = vadd.f32 %v1371, %v1572
  %v1574 = vpop.f32.mrb[0].mxu0
  %v1575 = vadd.f32 %v1375, %v1574
  %v1576 = vpop.f32.mrb[0].mxu0
  %v1577 = vadd.f32 %v1371, %v1576
  %v1578 = vpop.f32.mrb[0].mxu0
  %v1579 = vadd.f32 %v1375, %v1578
  %1580 = vmatprep.mubr.bf16.mxu0 %v1305
  %1581 = vmatmul.mubr.bf16.gmra.mrb[0].mxu0 %v1304
  %v1582 = vpop.f32.mrb[0].mxu0
  %v1583 = vadd.f32 %v1371, %v1582
  %v1584 = vpop.f32.mrb[0].mxu0
  %v1585 = vadd.f32 %v1375, %v1584
  %v1586 = vpop.f32.mrb[0].mxu0
  %v1587 = vadd.f32 %v1371, %v1586
  %v1588 = vpop.f32.mrb[0].mxu0
  %v1589 = vadd.f32 %v1375, %v1588
  %1590 = vmatprep.mubr.bf16.mxu0 %v1307
  %1591 = vmatmul.mubr.bf16.gmra.mrb[0].mxu0 %v1306
  %v1592 = vpop.f32.mrb[0].mxu0
  %v1593 = vadd.f32 %v1371, %v1592
  %v1594 = vpop.f32.mrb[0].mxu0
  %v1595 = vadd.f32 %v1375, %v1594
  %v1596 = vpop.f32.mrb[0].mxu0
  %v1597 = vadd.f32 %v1371, %v1596
  %v1598 = vpop.f32.mrb[0].mxu0
  %v1599 = vadd.f32 %v1375, %v1598
  %1600 = vmatprep.mubr.bf16.mxu0 %v1309
  %1601 = vmatmul.mubr.bf16.gmra.mrb[0].mxu0 %v1308
  %v1602 = vpop.f32.mrb[0].mxu0
  %v1603 = vadd.f32 %v1371, %v1602
  %v1604 = vpop.f32.mrb[0].mxu0
  %v1605 = vadd.f32 %v1375, %v1604
  %v1606 = vpop.f32.mrb[0].mxu0
  %v1607 = vadd.f32 %v1371, %v1606
  %v1608 = vpop.f32.mrb[0].mxu0
  %v1609 = vadd.f32 %v1375, %v1608
  %1610 = vmatprep.mubr.bf16.mxu0 %v1311
  %1611 = vmatmul.mubr.bf16.gmra.mrb[0].mxu0 %v1310
  %v1612 = vpop.f32.mrb[0].mxu0
  %v1613 = vadd.f32 %v1371, %v1612
  %v1614 = vpop.f32.mrb[0].mxu0
  %v1615 = vadd.f32 %v1375, %v1614
  %v1616 = vpop.f32.mrb[0].mxu0
  %v1617 = vadd.f32 %v1371, %v1616
  %v1618 = vpop.f32.mrb[0].mxu0
  %v1619 = vadd.f32 %v1375, %v1618
  %1620 = vmatprep.mubr.bf16.mxu0 %v1313
  %1621 = vmatmul.mubr.bf16.gmra.mrb[0].mxu0 %v1312
  %v1622 = vpop.f32.mrb[0].mxu0
  %v1623 = vadd.f32 %v1371, %v1622
  %v1624 = vpop.f32.mrb[0].mxu0
  %v1625 = vadd.f32 %v1375, %v1624
  %v1626 = vpop.f32.mrb[0].mxu0
  %v1627 = vadd.f32 %v1371, %v1626
  %v1628 = vpop.f32.mrb[0].mxu0
  %v1629 = vadd.f32 %v1375, %v1628
  %1630 = vmatprep.mubr.bf16.mxu0 %v1315
  %1631 = vmatmul.mubr.bf16.gmra.mrb[0].mxu0 %v1314
  %v1632 = vpop.f32.mrb[0].mxu0
  %v1633 = vadd.f32 %v1371, %v1632
  %v1634 = vpop.f32.mrb[0].mxu0
  %v1635 = vadd.f32 %v1375, %v1634
  %v1636 = vpop.f32.mrb[0].mxu0
  %v1637 = vadd.f32 %v1371, %v1636
  %v1638 = vpop.f32.mrb[0].mxu0
  %v1639 = vadd.f32 %v1375, %v1638
  %1640 = vmatprep.mubr.bf16.mxu0 %v1317
  %1641 = vmatmul.mubr.bf16.gmra.mrb[0].mxu0 %v1316
  %v1642 = vpop.f32.mrb[0].mxu0
  %v1643 = vadd.f32 %v1371, %v1642
  %v1644 = vpop.f32.mrb[0].mxu0
  %v1645 = vadd.f32 %v1375, %v1644
  %v1646 = vpop.f32.mrb[0].mxu0
  %v1647 = vadd.f32 %v1371, %v1646
  %v1648 = vpop.f32.mrb[0].mxu0
  %v1649 = vadd.f32 %v1375, %v1648
  %1650 = vmatprep.mubr.bf16.mxu0 %v1319
  %1651 = vmatmul.mubr.bf16.gmra.mrb[0].mxu0 %v1318
  %v1652 = vpop.f32.mrb[0].mxu0
  %v1653 = vadd.f32 %v1371, %v1652
  %v1654 = vpop.f32.mrb[0].mxu0
  %v1655 = vadd.f32 %v1375, %v1654
  %v1656 = vpop.f32.mrb[0].mxu0
  %v1657 = vadd.f32 %v1371, %v1656
  %v1658 = vpop.f32.mrb[0].mxu0
  %v1659 = vadd.f32 %v1375, %v1658
  %1660 = vmatprep.mubr.bf16.mxu0 %v1321
  %1661 = vmatmul.mubr.bf16.gmra.mrb[0].mxu0 %v1320
  %v1662 = vpop.f32.mrb[0].mxu0
  %v1663 = vadd.f32 %v1371, %v1662
  %v1664 = vpop.f32.mrb[0].mxu0
  %v1665 = vadd.f32 %v1375, %v1664
  %v1666 = vpop.f32.mrb[0].mxu0
  %v1667 = vadd.f32 %v1371, %v1666
  %v1668 = vpop.f32.mrb[0].mxu0
  %v1669 = vadd.f32 %v1375, %v1668
  %1670 = vmatprep.mubr.bf16.mxu0 %v1323
  %1671 = vmatmul.mubr.bf16.gmra.mrb[0].mxu0 %v1322
  %v1672 = vpop.f32.mrb[0].mxu0
  %v1673 = vadd.f32 %v1371, %v1672
  %v1674 = vpop.f32.mrb[0].mxu0
  %v1675 = vadd.f32 %v1375, %v1674
  %v1676 = vpop.f32.mrb[0].mxu0
  %v1677 = vadd.f32 %v1371, %v1676
  %v1678 = vpop.f32.mrb[0].mxu0
  %v1679 = vadd.f32 %v1375, %v1678
  %1680 = vmatprep.mubr.bf16.mxu0 %v1325
  %1681 = vmatmul.mubr.bf16.gmra.mrb[0].mxu0 %v1324
  %v1682 = vpop.f32.mrb[0].mxu0
  %v1683 = vadd.f32 %v1371, %v1682
  %v1684 = vpop.f32.mrb[0].mxu0
  %v1685 = vadd.f32 %v1375, %v1684
  %v1686 = vpop.f32.mrb[0].mxu0
  %v1687 = vadd.f32 %v1371, %v1686
  %v1688 = vpop.f32.mrb[0].mxu0
  %v1689 = vadd.f32 %v1375, %v1688
  %1690 = vmatprep.mubr.bf16.mxu0 %v1327
  %1691 = vmatmul.mubr.bf16.gmra.mrb[0].mxu0 %v1326
  %v1692 = vpop.f32.mrb[0].mxu0
  %v1693 = vadd.f32 %v1371, %v1692
  %v1694 = vpop.f32.mrb[0].mxu0
  %v1695 = vadd.f32 %v1375, %v1694
  %v1696 = vpop.f32.mrb[0].mxu0
  %v1697 = vadd.f32 %v1371, %v1696
  %v1698 = vpop.f32.mrb[0].mxu0
  %v1699 = vadd.f32 %v1375, %v1698
  %1700 = vmatprep.mubr.bf16.mxu0 %v1329
  %1701 = vmatmul.mubr.bf16.gmra.mrb[0].mxu0 %v1328
  %v1702 = vpop.f32.mrb[0].mxu0
  %v1703 = vadd.f32 %v1371, %v1702
  %v1704 = vpop.f32.mrb[0].mxu0
  %v1705 = vadd.f32 %v1375, %v1704
  %v1706 = vpop.f32.mrb[0].mxu0
  %v1707 = vadd.f32 %v1371, %v1706
  %v1708 = vpop.f32.mrb[0].mxu0
  %v1709 = vadd.f32 %v1375, %v1708
  %1710 = vmatprep.mubr.bf16.mxu0 %v1331
  %1711 = vmatmul.mubr.bf16.gmra.mrb[0].mxu0 %v1330
  %v1712 = vpop.f32.mrb[0].mxu0
  %v1713 = vadd.f32 %v1371, %v1712
  %v1714 = vpop.f32.mrb[0].mxu0
  %v1715 = vadd.f32 %v1375, %v1714
  %v1716 = vpop.f32.mrb[0].mxu0
  %v1717 = vadd.f32 %v1371, %v1716
  %v1718 = vpop.f32.mrb[0].mxu0
  %v1719 = vadd.f32 %v1375, %v1718
  %1720 = vmatprep.mubr.bf16.mxu0 %v1333
  %1721 = vmatmul.mubr.bf16.gmra.mrb[0].mxu0 %v1332
  %v1722 = vpop.f32.mrb[0].mxu0
  %v1723 = vadd.f32 %v1371, %v1722
  %v1724 = vpop.f32.mrb[0].mxu0
  %v1725 = vadd.f32 %v1375, %v1724
  %v1726 = vpop.f32.mrb[0].mxu0
  %v1727 = vadd.f32 %v1371, %v1726
  %v1728 = vpop.f32.mrb[0].mxu0
  %v1729 = vadd.f32 %v1375, %v1728
  %1730 = vdwg.mxu0
  %v1731 = vmax.f32 %v1573, 0.0
  %v1732 = vmax.f32 %v1575, 0.0
  %v1733 = vmax.f32 %v1577, 0.0
  %v1734 = vmax.f32 %v1579, 0.0
  %v1735 = vmax.f32 %v1583, 0.0
  %v1736 = vmax.f32 %v1585, 0.0
  %v1737 = vmax.f32 %v1587, 0.0
  %v1738 = vmax.f32 %v1589, 0.0
  %v1739 = vmax.f32 %v1593, 0.0
  %v1740 = vmax.f32 %v1595, 0.0
  %v1741 = vmax.f32 %v1597, 0.0
  %v1742 = vmax.f32 %v1599, 0.0
  %v1743 = vmax.f32 %v1603, 0.0
  %v1744 = vmax.f32 %v1605, 0.0
  %v1745 = vmax.f32 %v1607, 0.0
  %v1746 = vmax.f32 %v1609, 0.0
  %v1747 = vmax.f32 %v1613, 0.0
  %v1748 = vmax.f32 %v1615, 0.0
  %v1749 = vmax.f32 %v1617, 0.0
  %v1750 = vmax.f32 %v1619, 0.0
  %v1751 = vmax.f32 %v1623, 0.0
  %v1752 = vmax.f32 %v1625, 0.0
  %v1753 = vmax.f32 %v1627, 0.0
  %v1754 = vmax.f32 %v1629, 0.0
  %v1755 = vmax.f32 %v1633, 0.0
  %v1756 = vmax.f32 %v1635, 0.0
  %v1757 = vmax.f32 %v1637, 0.0
  %v1758 = vmax.f32 %v1639, 0.0
  %v1759 = vmax.f32 %v1643, 0.0
  %v1760 = vmax.f32 %v1645, 0.0
  %v1761 = vmax.f32 %v1647, 0.0
  %v1762 = vmax.f32 %v1649, 0.0
  %v1763 = vmax.f32 %v1653, 0.0
  %v1764 = vmax.f32 %v1655, 0.0
  %v1765 = vmax.f32 %v1657, 0.0
  %v1766 = vmax.f32 %v1659, 0.0
  %v1767 = vmax.f32 %v1663, 0.0
  %v1768 = vmax.f32 %v1665, 0.0
  %v1769 = vmax.f32 %v1667, 0.0
  %v1770 = vmax.f32 %v1669, 0.0
  %v1771 = vmax.f32 %v1673, 0.0
  %v1772 = vmax.f32 %v1675, 0.0
  %v1773 = vmax.f32 %v1677, 0.0
  %v1774 = vmax.f32 %v1679, 0.0
  %v1775 = vmax.f32 %v1683, 0.0
  %v1776 = vmax.f32 %v1685, 0.0
  %v1777 = vmax.f32 %v1687, 0.0
  %v1778 = vmax.f32 %v1689, 0.0
  %v1779 = vmax.f32 %v1693, 0.0
  %v1780 = vmax.f32 %v1695, 0.0
  %v1781 = vmax.f32 %v1697, 0.0
  %v1782 = vmax.f32 %v1699, 0.0
  %v1783 = vmax.f32 %v1703, 0.0
  %v1784 = vmax.f32 %v1705, 0.0
  %v1785 = vmax.f32 %v1707, 0.0
  %v1786 = vmax.f32 %v1709, 0.0
  %v1787 = vmax.f32 %v1713, 0.0
  %v1788 = vmax.f32 %v1715, 0.0
  %v1789 = vmax.f32 %v1717, 0.0
  %v1790 = vmax.f32 %v1719, 0.0
  %v1791 = vmax.f32 %v1723, 0.0
  %v1792 = vmax.f32 %v1725, 0.0
  %v1793 = vmax.f32 %v1727, 0.0
  %v1794 = vmax.f32 %v1729, 0.0
  %v1795 = vpack.c.bf16 %v1733, %v1731
  %v1796 = vpack.c.bf16 %v1734, %v1732
  %v1797 = vpack.c.bf16 %v1737, %v1735
  %v1798 = vpack.c.bf16 %v1738, %v1736
  %v1799 = vpack.c.bf16 %v1741, %v1739
  %v1800 = vpack.c.bf16 %v1742, %v1740
  %v1801 = vpack.c.bf16 %v1745, %v1743
  %v1802 = vpack.c.bf16 %v1746, %v1744
  %v1803 = vpack.c.bf16 %v1749, %v1747
  %v1804 = vpack.c.bf16 %v1750, %v1748
  %v1805 = vpack.c.bf16 %v1753, %v1751
  %v1806 = vpack.c.bf16 %v1754, %v1752
  %v1807 = vpack.c.bf16 %v1757, %v1755
  %v1808 = vpack.c.bf16 %v1758, %v1756
  %v1809 = vpack.c.bf16 %v1761, %v1759
  %v1810 = vpack.c.bf16 %v1762, %v1760
  %v1811 = vpack.c.bf16 %v1765, %v1763
  %v1812 = vpack.c.bf16 %v1766, %v1764
  %v1813 = vpack.c.bf16 %v1769, %v1767
  %v1814 = vpack.c.bf16 %v1770, %v1768
  %v1815 = vpack.c.bf16 %v1773, %v1771
  %v1816 = vpack.c.bf16 %v1774, %v1772
  %v1817 = vpack.c.bf16 %v1777, %v1775
  %v1818 = vpack.c.bf16 %v1778, %v1776
  %v1819 = vpack.c.bf16 %v1781, %v1779
  %v1820 = vpack.c.bf16 %v1782, %v1780
  %v1821 = vpack.c.bf16 %v1785, %v1783
  %v1822 = vpack.c.bf16 %v1786, %v1784
  %v1823 = vpack.c.bf16 %v1789, %v1787
  %v1824 = vpack.c.bf16 %v1790, %v1788
  %v1825 = vpack.c.bf16 %v1793, %v1791
  %v1826 = vpack.c.bf16 %v1794, %v1792
  %v1827 = vld [vmem:[%s7] sm:$0xf]
  %v1828 = vld [vmem:[%s7 + $0x4] sm:$0xf]
  %v1829 = vld [vmem:[%s7 + $0x8] sm:$0xf]
  %v1830 = vld [vmem:[%s7 + $0xc] sm:$0xf]
  %v1831 = vld [vmem:[%s7 + $0x10] sm:$0xf]
  %v1832 = vld [vmem:[%s7 + $0x14] sm:$0xf]
  %v1833 = vld [vmem:[%s7 + $0x18] sm:$0xf]
  %v1834 = vld [vmem:[%s7 + $0x1c] sm:$0xf]
  %v1835 = vld [vmem:[%s7 + $0x20] sm:$0xf]
  %v1836 = vld [vmem:[%s7 + $0x24] sm:$0xf]
  %v1837 = vld [vmem:[%s7 + $0x28] sm:$0xf]
  %v1838 = vld [vmem:[%s7 + $0x2c] sm:$0xf]
  %v1839 = vld [vmem:[%s7 + $0x30] sm:$0xf]
  %v1840 = vld [vmem:[%s7 + $0x34] sm:$0xf]
  %v1841 = vld [vmem:[%s7 + $0x38] sm:$0xf]
  %v1842 = vld [vmem:[%s7 + $0x3c] sm:$0xf]
  %v1843 = vld [vmem:[%s7 + $0x40] sm:$0xf]
  %v1844 = vld [vmem:[%s7 + $0x44] sm:$0xf]
  %v1845 = vld [vmem:[%s7 + $0x48] sm:$0xf]
  %v1846 = vld [vmem:[%s7 + $0x4c] sm:$0xf]
  %v1847 = vld [vmem:[%s7 + $0x50] sm:$0xf]
  %v1848 = vld [vmem:[%s7 + $0x54] sm:$0xf]
  %v1849 = vld [vmem:[%s7 + $0x58] sm:$0xf]
  %v1850 = vld [vmem:[%s7 + $0x5c] sm:$0xf]
  %v1851 = vld [vmem:[%s7 + $0x60] sm:$0xf]
  %v1852 = vld [vmem:[%s7 + $0x64] sm:$0xf]
  %v1853 = vld [vmem:[%s7 + $0x68] sm:$0xf]
  %v1854 = vld [vmem:[%s7 + $0x6c] sm:$0xf]
  %v1855 = vld [vmem:[%s7 + $0x70] sm:$0xf]
  %v1856 = vld [vmem:[%s7 + $0x74] sm:$0xf]
  %v1857 = vld [vmem:[%s7 + $0x78] sm:$0xf]
  %v1858 = vld [vmem:[%s7 + $0x7c] sm:$0xf]
  %v1859 = vld [vmem:[%s8] sm:$0x1]
  %v1861 = vlaneseq
  %v1862 = vshrl.u32 %v1861, 7
  %v1863 = vsub.s32 0, %v1862
  %v1864 = vrot.slane %v1859, %v1863
  %v1898 = vunpack.c.l.b16 %v1827
  %v1899 = vunpack.c.l.b16 %v1828
  %v1900 = vunpack.c.l.b16 %v1829
  %v1901 = vunpack.c.l.b16 %v1830
  %v1902 = vunpack.c.l.b16 %v1831
  %v1903 = vunpack.c.l.b16 %v1832
  %v1904 = vunpack.c.l.b16 %v1833
  %v1905 = vunpack.c.l.b16 %v1834
  %v1906 = vunpack.c.l.b16 %v1835
  %v1907 = vunpack.c.l.b16 %v1836
  %v1908 = vunpack.c.l.b16 %v1837
  %v1909 = vunpack.c.l.b16 %v1838
  %v1910 = vunpack.c.l.b16 %v1839
  %v1911 = vunpack.c.l.b16 %v1840
  %v1912 = vunpack.c.l.b16 %v1841
  %v1913 = vunpack.c.l.b16 %v1842
  %v1914 = vunpack.c.l.b16 %v1843
  %v1915 = vunpack.c.l.b16 %v1844
  %v1916 = vunpack.c.l.b16 %v1845
  %v1917 = vunpack.c.l.b16 %v1846
  %v1918 = vunpack.c.l.b16 %v1847
  %v1919 = vunpack.c.l.b16 %v1848
  %v1920 = vunpack.c.l.b16 %v1849
  %v1921 = vunpack.c.l.b16 %v1850
  %v1922 = vunpack.c.l.b16 %v1851
  %v1923 = vunpack.c.l.b16 %v1852
  %v1924 = vunpack.c.l.b16 %v1853
  %v1925 = vunpack.c.l.b16 %v1854
  %v1926 = vunpack.c.l.b16 %v1855
  %v1927 = vunpack.c.l.b16 %v1856
  %v1928 = vunpack.c.l.b16 %v1857
  %v1929 = vunpack.c.l.b16 %v1858
  %v1930 = vpack.c.b16 %v1899, %v1898
  %v1931 = vpack.c.b16 %v1901, %v1900
  %v1932 = vpack.c.b16 %v1903, %v1902
  %v1933 = vpack.c.b16 %v1905, %v1904
  %v1934 = vpack.c.b16 %v1907, %v1906
  %v1935 = vpack.c.b16 %v1909, %v1908
  %v1936 = vpack.c.b16 %v1911, %v1910
  %v1937 = vpack.c.b16 %v1913, %v1912
  %v1938 = vpack.c.b16 %v1915, %v1914
  %v1939 = vpack.c.b16 %v1917, %v1916
  %v1940 = vpack.c.b16 %v1919, %v1918
  %v1941 = vpack.c.b16 %v1921, %v1920
  %v1942 = vpack.c.b16 %v1923, %v1922
  %v1943 = vpack.c.b16 %v1925, %v1924
  %v1944 = vpack.c.b16 %v1927, %v1926
  %v1945 = vpack.c.b16 %v1929, %v1928
  %1962 = vmatprep.subr.bf16.mxu0 0
  %1963 = vmatpush1.bf16.msra.mxu0 %v1930
  %1964 = vmatprep.subr.bf16.mxu0 0
  %1965 = vmatpush1.bf16.msra.mxu0 %v1931
  %1966 = vmatprep.subr.bf16.mxu0 0
  %1967 = vmatpush1.bf16.msra.mxu0 %v1932
  %1968 = vmatprep.subr.bf16.mxu0 0
  %1969 = vmatpush1.bf16.msra.mxu0 %v1933
  %1970 = vmatprep.subr.bf16.mxu0 0
  %1971 = vmatpush1.bf16.msra.mxu0 %v1934
  %1972 = vmatprep.subr.bf16.mxu0 0
  %1973 = vmatpush1.bf16.msra.mxu0 %v1935
  %1974 = vmatprep.subr.bf16.mxu0 0
  %1975 = vmatpush1.bf16.msra.mxu0 %v1936
  %1976 = vmatprep.subr.bf16.mxu0 0
  %1977 = vmatpush1.bf16.msra.mxu0 %v1937
  %1978 = vmatprep.subr.bf16.mxu0 0
  %1979 = vmatpush1.bf16.msra.mxu0 %v1938
  %1980 = vmatprep.subr.bf16.mxu0 0
  %1981 = vmatpush1.bf16.msra.mxu0 %v1939
  %1982 = vmatprep.subr.bf16.mxu0 0
  %1983 = vmatpush1.bf16.msra.mxu0 %v1940
  %1984 = vmatprep.subr.bf16.mxu0 0
  %1985 = vmatpush1.bf16.msra.mxu0 %v1941
  %1986 = vmatprep.subr.bf16.mxu0 0
  %1987 = vmatpush1.bf16.msra.mxu0 %v1942
  %1988 = vmatprep.subr.bf16.mxu0 0
  %1989 = vmatpush1.bf16.msra.mxu0 %v1943
  %1990 = vmatprep.subr.bf16.mxu0 0
  %1991 = vmatpush1.bf16.msra.mxu0 %v1944
  %1992 = vmatprep.subr.bf16.mxu0 0
  %1993 = vmatpush1.bf16.msra.mxu0 %v1945
  %1994 = vmatprep.mubr.bf16.mxu0 %v1796
  %1995 = vmatmul.mubr.bf16.gmra.mrb[0].mxu0 %v1795
  %v1996 = vpop.f32.mrb[0].mxu0
  %v1997 = vadd.f32 %v1864, %v1996
  %v1998 = vpop.f32.mrb[0].mxu0
  %v1999 = vpop.f32.mrb[0].mxu0
  %v2000 = vadd.f32 %v1864, %v1999
  %v2001 = vpop.f32.mrb[0].mxu0
  %2002 = vmatprep.mubr.bf16.mxu0 %v1798
  %2003 = vmatmul.mubr.bf16.gmra.mrb[0].mxu0 %v1797
  %v2004 = vpop.f32.mrb[0].mxu0
  %v2005 = vadd.f32 %v1864, %v2004
  %v2006 = vpop.f32.mrb[0].mxu0
  %v2007 = vpop.f32.mrb[0].mxu0
  %v2008 = vadd.f32 %v1864, %v2007
  %v2009 = vpop.f32.mrb[0].mxu0
  %2010 = vmatprep.mubr.bf16.mxu0 %v1800
  %2011 = vmatmul.mubr.bf16.gmra.mrb[0].mxu0 %v1799
  %v2012 = vpop.f32.mrb[0].mxu0
  %v2013 = vadd.f32 %v1864, %v2012
  %v2014 = vpop.f32.mrb[0].mxu0
  %v2015 = vpop.f32.mrb[0].mxu0
  %v2016 = vadd.f32 %v1864, %v2015
  %v2017 = vpop.f32.mrb[0].mxu0
  %2018 = vmatprep.mubr.bf16.mxu0 %v1802
  %2019 = vmatmul.mubr.bf16.gmra.mrb[0].mxu0 %v1801
  %v2020 = vpop.f32.mrb[0].mxu0
  %v2021 = vadd.f32 %v1864, %v2020
  %v2022 = vpop.f32.mrb[0].mxu0
  %v2023 = vpop.f32.mrb[0].mxu0
  %v2024 = vadd.f32 %v1864, %v2023
  %v2025 = vpop.f32.mrb[0].mxu0
  %2026 = vmatprep.mubr.bf16.mxu0 %v1804
  %2027 = vmatmul.mubr.bf16.gmra.mrb[0].mxu0 %v1803
  %v2028 = vpop.f32.mrb[0].mxu0
  %v2029 = vadd.f32 %v1864, %v2028
  %v2030 = vpop.f32.mrb[0].mxu0
  %v2031 = vpop.f32.mrb[0].mxu0
  %v2032 = vadd.f32 %v1864, %v2031
  %v2033 = vpop.f32.mrb[0].mxu0
  %2034 = vmatprep.mubr.bf16.mxu0 %v1806
  %2035 = vmatmul.mubr.bf16.gmra.mrb[0].mxu0 %v1805
  %v2036 = vpop.f32.mrb[0].mxu0
  %v2037 = vadd.f32 %v1864, %v2036
  %v2038 = vpop.f32.mrb[0].mxu0
  %v2039 = vpop.f32.mrb[0].mxu0
  %v2040 = vadd.f32 %v1864, %v2039
  %v2041 = vpop.f32.mrb[0].mxu0
  %2042 = vmatprep.mubr.bf16.mxu0 %v1808
  %2043 = vmatmul.mubr.bf16.gmra.mrb[0].mxu0 %v1807
  %v2044 = vpop.f32.mrb[0].mxu0
  %v2045 = vadd.f32 %v1864, %v2044
  %v2046 = vpop.f32.mrb[0].mxu0
  %v2047 = vpop.f32.mrb[0].mxu0
  %v2048 = vadd.f32 %v1864, %v2047
  %v2049 = vpop.f32.mrb[0].mxu0
  %2050 = vmatprep.mubr.bf16.mxu0 %v1810
  %2051 = vmatmul.mubr.bf16.gmra.mrb[0].mxu0 %v1809
  %v2052 = vpop.f32.mrb[0].mxu0
  %v2053 = vadd.f32 %v1864, %v2052
  %v2054 = vpop.f32.mrb[0].mxu0
  %v2055 = vpop.f32.mrb[0].mxu0
  %v2056 = vadd.f32 %v1864, %v2055
  %v2057 = vpop.f32.mrb[0].mxu0
  %2058 = vmatprep.mubr.bf16.mxu0 %v1812
  %2059 = vmatmul.mubr.bf16.gmra.mrb[0].mxu0 %v1811
  %v2060 = vpop.f32.mrb[0].mxu0
  %v2061 = vadd.f32 %v1864, %v2060
  %v2062 = vpop.f32.mrb[0].mxu0
  %v2063 = vpop.f32.mrb[0].mxu0
  %v2064 = vadd.f32 %v1864, %v2063
  %v2065 = vpop.f32.mrb[0].mxu0
  %2066 = vmatprep.mubr.bf16.mxu0 %v1814
  %2067 = vmatmul.mubr.bf16.gmra.mrb[0].mxu0 %v1813
  %v2068 = vpop.f32.mrb[0].mxu0
  %v2069 = vadd.f32 %v1864, %v2068
  %v2070 = vpop.f32.mrb[0].mxu0
  %v2071 = vpop.f32.mrb[0].mxu0
  %v2072 = vadd.f32 %v1864, %v2071
  %v2073 = vpop.f32.mrb[0].mxu0
  %2074 = vmatprep.mubr.bf16.mxu0 %v1816
  %2075 = vmatmul.mubr.bf16.gmra.mrb[0].mxu0 %v1815
  %v2076 = vpop.f32.mrb[0].mxu0
  %v2077 = vadd.f32 %v1864, %v2076
  %v2078 = vpop.f32.mrb[0].mxu0
  %v2079 = vpop.f32.mrb[0].mxu0
  %v2080 = vadd.f32 %v1864, %v2079
  %v2081 = vpop.f32.mrb[0].mxu0
  %2082 = vmatprep.mubr.bf16.mxu0 %v1818
  %2083 = vmatmul.mubr.bf16.gmra.mrb[0].mxu0 %v1817
  %v2084 = vpop.f32.mrb[0].mxu0
  %v2085 = vadd.f32 %v1864, %v2084
  %v2086 = vpop.f32.mrb[0].mxu0
  %v2087 = vpop.f32.mrb[0].mxu0
  %v2088 = vadd.f32 %v1864, %v2087
  %v2089 = vpop.f32.mrb[0].mxu0
  %2090 = vmatprep.mubr.bf16.mxu0 %v1820
  %2091 = vmatmul.mubr.bf16.gmra.mrb[0].mxu0 %v1819
  %v2092 = vpop.f32.mrb[0].mxu0
  %v2093 = vadd.f32 %v1864, %v2092
  %v2094 = vpop.f32.mrb[0].mxu0
  %v2095 = vpop.f32.mrb[0].mxu0
  %v2096 = vadd.f32 %v1864, %v2095
  %v2097 = vpop.f32.mrb[0].mxu0
  %2098 = vmatprep.mubr.bf16.mxu0 %v1822
  %2099 = vmatmul.mubr.bf16.gmra.mrb[0].mxu0 %v1821
  %v2100 = vpop.f32.mrb[0].mxu0
  %v2101 = vadd.f32 %v1864, %v2100
  %v2102 = vpop.f32.mrb[0].mxu0
  %v2103 = vpop.f32.mrb[0].mxu0
  %v2104 = vadd.f32 %v1864, %v2103
  %v2105 = vpop.f32.mrb[0].mxu0
  %2106 = vmatprep.mubr.bf16.mxu0 %v1824
  %2107 = vmatmul.mubr.bf16.gmra.mrb[0].mxu0 %v1823
  %v2108 = vpop.f32.mrb[0].mxu0
  %v2109 = vadd.f32 %v1864, %v2108
  %v2110 = vpop.f32.mrb[0].mxu0
  %v2111 = vpop.f32.mrb[0].mxu0
  %v2112 = vadd.f32 %v1864, %v2111
  %v2113 = vpop.f32.mrb[0].mxu0
  %2114 = vmatprep.mubr.bf16.mxu0 %v1826
  %2115 = vmatmul.mubr.bf16.gmra.mrb[0].mxu0 %v1825
  %v2116 = vpop.f32.mrb[0].mxu0
  %v2117 = vadd.f32 %v1864, %v2116
  %v2118 = vpop.f32.mrb[0].mxu0
  %v2119 = vpop.f32.mrb[0].mxu0
  %v2120 = vadd.f32 %v1864, %v2119
  %v2121 = vpop.f32.mrb[0].mxu0
  %2122 = vdwg.mxu0
  %vm2123 = vcmask 15360
  %2124 = vst.msk [vmem:[%s9] sm:$0xff] %vm2123, %v1997
  %2125 = vst.msk [vmem:[%s9 + $0x8] sm:$0xff] %vm2123, %v2000
  %2126 = vst.msk [vmem:[%s9 + $0x10] sm:$0xff] %vm2123, %v2005
  %2127 = vst.msk [vmem:[%s9 + $0x18] sm:$0xff] %vm2123, %v2008
  %2128 = vst.msk [vmem:[%s9 + $0x20] sm:$0xff] %vm2123, %v2013
  %2129 = vst.msk [vmem:[%s9 + $0x28] sm:$0xff] %vm2123, %v2016
  %2130 = vst.msk [vmem:[%s9 + $0x30] sm:$0xff] %vm2123, %v2021
  %2131 = vst.msk [vmem:[%s9 + $0x38] sm:$0xff] %vm2123, %v2024
  %2132 = vst.msk [vmem:[%s9 + $0x40] sm:$0xff] %vm2123, %v2029
  %2133 = vst.msk [vmem:[%s9 + $0x48] sm:$0xff] %vm2123, %v2032
  %2134 = vst.msk [vmem:[%s9 + $0x50] sm:$0xff] %vm2123, %v2037
  %2135 = vst.msk [vmem:[%s9 + $0x58] sm:$0xff] %vm2123, %v2040
  %2136 = vst.msk [vmem:[%s9 + $0x60] sm:$0xff] %vm2123, %v2045
  %2137 = vst.msk [vmem:[%s9 + $0x68] sm:$0xff] %vm2123, %v2048
  %2138 = vst.msk [vmem:[%s9 + $0x70] sm:$0xff] %vm2123, %v2053
  %2139 = vst.msk [vmem:[%s9 + $0x78] sm:$0xff] %vm2123, %v2056
  %2140 = vst.msk [vmem:[%s9 + $0x80] sm:$0xff] %vm2123, %v2061
  %2141 = vst.msk [vmem:[%s9 + $0x88] sm:$0xff] %vm2123, %v2064
  %2142 = vst.msk [vmem:[%s9 + $0x90] sm:$0xff] %vm2123, %v2069
  %2143 = vst.msk [vmem:[%s9 + $0x98] sm:$0xff] %vm2123, %v2072
  %2144 = vst.msk [vmem:[%s9 + $0xa0] sm:$0xff] %vm2123, %v2077
  %2145 = vst.msk [vmem:[%s9 + $0xa8] sm:$0xff] %vm2123, %v2080
  %2146 = vst.msk [vmem:[%s9 + $0xb0] sm:$0xff] %vm2123, %v2085
  %2147 = vst.msk [vmem:[%s9 + $0xb8] sm:$0xff] %vm2123, %v2088
  %2148 = vst.msk [vmem:[%s9 + $0xc0] sm:$0xff] %vm2123, %v2093
  %2149 = vst.msk [vmem:[%s9 + $0xc8] sm:$0xff] %vm2123, %v2096
  %2150 = vst.msk [vmem:[%s9 + $0xd0] sm:$0xff] %vm2123, %v2101
  %2151 = vst.msk [vmem:[%s9 + $0xd8] sm:$0xff] %vm2123, %v2104
  %2152 = vst.msk [vmem:[%s9 + $0xe0] sm:$0xff] %vm2123, %v2109
  %2153 = vst.msk [vmem:[%s9 + $0xe8] sm:$0xff] %vm2123, %v2112
  %2154 = vst.msk [vmem:[%s9 + $0xf0] sm:$0xff] %vm2123, %v2117
  %2155 = vst.msk [vmem:[%s9 + $0xf8] sm:$0xff] %vm2123, %v2120
  // Predicated region
  $region38: #{mlp_forward.1} parent=0 // pred_check
    _
  $region39: #{mlp_forward.1} parent=0 // pred_check_branch
    %2157 = sbr.rel (0) target = $region41
  $region40: #{mlp_forward.1} parent=0 // pred_region
    _
  $region41: #{mlp_forward.1} parent=0 // pred_fallthru
    _
  // Predicated region
  $region42: #{mlp_forward.1} parent=0 // pred_check
    _
  $region43: #{mlp_forward.1} parent=0 // pred_check_branch
    %2159 = sbr.rel (0) target = $region45
  $region44: #{mlp_forward.1} parent=0 // pred_region
    _
  $region45: #{mlp_forward.1} parent=0 // pred_fallthru
    _

</llo_original>
